<compile_context>
chip_gen: v5e
topology: v5e:2x2
jax: 0.10.0
libtpu: 0.0.40
codegen_flags: <defaults>
</compile_context>

<pallas_src>
import functools

import jax
import jax.numpy as jnp
from jax.experimental import pallas as pl
from jax.experimental.pallas import tpu as pltpu


def generator_rnn_kernel(data_ref, noise_ref, w_ref, bias_ref, out_ref,
                         *, hidden, input_size, t_enc, t_dec, batch):
    f32 = jnp.float32
    h3 = 3 * hidden
    d = input_size

    # ---- unpack packed weights / biases (static slices, one-time loads) ----
    wih_t = w_ref[0:d, 0:h3]                        # (D, 3H)
    whh_t = w_ref[d:d + hidden, 0:h3]               # (H, 3H)
    w_both = w_ref[d + hidden:d + 2 * hidden, :]    # (H, 3H+D) = [Wfc^T Wih^T | Wfc^T]
    bias = bias_ref[...]                            # (3, 3H+D)
    b_x = bias[0:1, 0:h3]                           # x-side bias + folded h-side r/z bias
    b_hn = bias[1:2, 0:hidden]                      # h-side bias of the n gate only
    b_both = bias[2:3, :]                           # [bfc @ Wih^T | bfc]

    # ---- hoisted x-projection: all encoder steps + decoder step-0 input ----
    # One matmul; result stays in vregs and is sliced with static offsets below.
    gi_all = jnp.dot(data_ref[...], wih_t, preferred_element_type=f32) + b_x

    def gru_from_gi(gi, h):
        # gi already holds x @ Wih^T + (b_ih + [b_hr, b_hz, 0]); only the
        # h-projection sits on the recurrent critical path (one MXU push).
        gh = jnp.dot(h, whh_t, preferred_element_type=f32)          # (B, 3H)
        s = jax.nn.sigmoid(gi + gh)       # full-width add + ONE sigmoid (r and z)
        r = s[:, 0:hidden]
        z = s[:, hidden:2 * hidden]
        n = jnp.tanh(gi[:, 2 * hidden:] + r * (gh[:, 2 * hidden:] + b_hn))
        return (1.0 - z) * n + z * h

    # ---- encoder: fully unrolled, static slices of the hoisted projection ----
    state = jnp.zeros((batch, hidden), f32)
    for i in range(t_enc):
        state = gru_from_gi(gi_all[i * batch:(i + 1) * batch, :], state)

    # ---- add uniform[0,1) noise to the hidden state ----
    state = state + noise_ref[...]

    # ---- decoder: autoregressive, carrying gi instead of the fed-back input ----
    inp = data_ref[t_enc * batch:(t_enc + 1) * batch, :]            # dec step-0 input
    gi = gi_all[t_enc * batch:(t_enc + 1) * batch, :]               # its x-projection

    outs = []
    for _ in range(t_dec):
        state = gru_from_gi(gi, state)
        # fused: gi update and fc/output share LHS `state` -> one MXU push
        both = jnp.dot(state, w_both, preferred_element_type=f32) + b_both  # (B, 3H+D)
        gi = gi + both[:, 0:h3]           # gi_{i+1} = gi_i + state@(Wfc^T Wih^T) + bfc@Wih^T
        out = inp + both[:, h3:]          # output_i = inp_i + fc1(state_{i+1})
        outs.append(out)
        inp = out

    # single dense store of all decoder outputs (off the recurrence chain)
    out_ref[...] = jnp.stack(outs, axis=0).astype(out_ref.dtype)


@jax.jit
def generator_rnn_forward(encoder_inputs, decoder_inputs, noise, params):
    """encoder_inputs: (B, T_enc, D), decoder_inputs: (B, T_dec, D), noise: (B, H)."""
    wih, whh, bih, bhh, wfc, bfc = params
    b, t_enc, d = encoder_inputs.shape
    t_dec = decoder_inputs.shape[1]
    hidden = whh.shape[1]
    h3 = 3 * hidden
    width = h3 + d
    f32 = jnp.float32
    hi = jax.lax.Precision.HIGHEST

    # --- parameter prep (inside jit: fused / constant-folded, not per-call eager) ---
    wih_t = wih.T.astype(f32)                        # (D, 3H)
    whh_t = whh.T.astype(f32)                        # (H, 3H)
    wfc_t = wfc.T.astype(f32)                        # (H, D)
    bih = bih.astype(f32)
    bhh = bhh.astype(f32)
    bfc_row = bfc.astype(f32).reshape(1, d)
    # fold the h-side r/z biases into the x-side bias (n gate keeps b_hn apart)
    b_x = (bih + jnp.concatenate([bhh[:2 * hidden], jnp.zeros((hidden,), f32)])
           ).reshape(1, h3)
    b_hn = bhh[2 * hidden:].reshape(1, hidden)
    # decoder carried-gi constants and the fused decoder RHS [w_comb | wfc_t]
    w_comb = jnp.dot(wfc_t, wih_t, precision=hi)     # (H, 3H)
    b_comb = jnp.dot(bfc_row, wih_t, precision=hi)   # (1, 3H)
    w_both = jnp.concatenate([w_comb, wfc_t], axis=1)      # (H, 3H+D)
    b_both = jnp.concatenate([b_comb, bfc_row], axis=1)    # (1, 3H+D)

    # --- pack inputs to cut entry DMAs: data / noise / weights / biases ---
    enc2d = jnp.transpose(encoder_inputs, (1, 0, 2)).reshape(t_enc * b, d).astype(f32)
    dec0 = decoder_inputs[:, 0, :].astype(f32)       # only decoder step 0 is consumed
    data = jnp.concatenate([enc2d, dec0], axis=0)    # ((T_enc+1)*B, D)

    w_pack = jnp.concatenate([
        jnp.pad(jnp.concatenate([wih_t, whh_t], axis=0), ((0, 0), (0, width - h3))),
        w_both,
    ], axis=0)                                       # (D+2H, 3H+D)

    b_pack = jnp.stack([
        jnp.pad(b_x[0], (0, width - h3)),
        jnp.pad(b_hn[0], (0, width - hidden)),
        b_both[0],
    ], axis=0)                                       # (3, 3H+D)

    kernel = functools.partial(
        generator_rnn_kernel, hidden=hidden, input_size=d,
        t_enc=t_enc, t_dec=t_dec, batch=b)

    n_steps = t_enc + t_dec
    cost = pl.CostEstimate(
        flops=(2 * (t_enc + 1) * b * d * h3           # hoisted x-projection (+ gi0)
               + 2 * n_steps * b * hidden * h3        # per-step h projection
               + 2 * t_dec * b * hidden * width),     # fused decoder gi-update + fc
        transcendentals=n_steps * b * (h3 + hidden),
        bytes_accessed=4 * (data.size + noise.size + w_pack.size + b_pack.size
                            + t_dec * b * d),
    )

    vmem = pl.BlockSpec(memory_space=pltpu.MemorySpace.VMEM)
    out_tm = pl.pallas_call(
        kernel,
        out_shape=jax.ShapeDtypeStruct((t_dec, b, d), f32),
        in_specs=[vmem] * 4,
        out_specs=vmem,
        cost_estimate=cost,
    )(data, noise.astype(f32), w_pack, b_pack)

    return jnp.transpose(out_tm, (1, 0, 2))          # back to (B, T_dec, D)


def _reference_forward(encoder_inputs, decoder_inputs, noise, params):
    """Pure-JAX reference of the PyTorch forward (eval mode)."""
    wih, whh, bih, bhh, wfc, bfc = params
    b = encoder_inputs.shape[0]
    hidden = whh.shape[1]

    def gru(x, h):
        gi = x @ wih.T + bih
        gh = h @ whh.T + bhh
        i_r, i_z, i_n = jnp.split(gi, 3, axis=1)
        h_r, h_z, h_n = jnp.split(gh, 3, axis=1)
        r = jax.nn.sigmoid(i_r + h_r)
        z = jax.nn.sigmoid(i_z + h_z)
        n = jnp.tanh(i_n + r * h_n)
        return (1.0 - z) * n + z * h

    state = jnp.zeros((b, hidden), jnp.float32)
    for i in range(encoder_inputs.shape[1]):
        state = gru(encoder_inputs[:, i], state)
    state = state + noise
    outs = []
    inp = decoder_inputs[:, 0]
    for i in range(decoder_inputs.shape[1]):
        state = gru(inp, state)
        out = inp + (state @ wfc.T + bfc)
        outs.append(out)
        inp = out
    return jnp.stack(outs, axis=1)


if __name__ == "__main__":
    # Module hyperparameters (small, consistent with the forward pass)
    source_seq_len = 8        # encoder runs source_seq_len - 1 = 7 steps
    target_seq_len = 8
    rnn_size = 32
    number_of_actions = 10
    human_dofs = 54
    input_size = human_dofs + number_of_actions   # 64
    batch = 8

    key = jax.random.PRNGKey(0)
    keys = jax.random.split(key, 10)

    # Deterministic parameter init (PyTorch-style uniform bounds)
    k_gru = 1.0 / jnp.sqrt(jnp.float32(rnn_size))
    k_fc = 1.0 / jnp.sqrt(jnp.float32(rnn_size))
    wih = jax.random.uniform(keys[0], (3 * rnn_size, input_size), jnp.float32, -k_gru, k_gru)
    whh = jax.random.uniform(keys[1], (3 * rnn_size, rnn_size), jnp.float32, -k_gru, k_gru)
    bih = jax.random.uniform(keys[2], (3 * rnn_size,), jnp.float32, -k_gru, k_gru)
    bhh = jax.random.uniform(keys[3], (3 * rnn_size,), jnp.float32, -k_gru, k_gru)
    wfc = jax.random.uniform(keys[4], (input_size, rnn_size), jnp.float32, -k_fc, k_fc)
    bfc = jax.random.uniform(keys[5], (input_size,), jnp.float32, -k_fc, k_fc)
    params = (wih, whh, bih, bhh, wfc, bfc)

    # Inputs (batch-major, like the PyTorch module receives)
    encoder_inputs = jax.random.normal(keys[6], (batch, source_seq_len - 1, input_size), jnp.float32)
    decoder_inputs = jax.random.normal(keys[7], (batch, target_seq_len, input_size), jnp.float32)
    # torch.rand -> uniform [0, 1) noise added to the hidden state
    noise = jax.random.uniform(keys[8], (batch, rnn_size), jnp.float32)

    out = generator_rnn_forward(encoder_inputs, decoder_inputs, noise, params)
    out = jax.block_until_ready(out)

    ref = _reference_forward(encoder_inputs, decoder_inputs, noise, params)
    assert out.shape == (batch, target_seq_len, input_size)
    assert jnp.allclose(out, ref, atol=1e-4, rtol=1e-4), "mismatch vs reference"

    print("KERNEL_OK")
</pallas_src>

<mosaic_0001>
module attributes {stable_mosaic.version = 11 : i64} {
  func.func @generator_rnn_kernel(%arg0: memref<64x64xf32, #tpu.memory_space<vmem>>, %arg1: memref<8x32xf32, #tpu.memory_space<vmem>>, %arg2: memref<128x160xf32, #tpu.memory_space<vmem>>, %arg3: memref<3x160xf32, #tpu.memory_space<vmem>>, %arg4: memref<8x8x64xf32, #tpu.memory_space<vmem>>) attributes {dimension_semantics = [], scalar_prefetch = 0 : i64, scratch_operands = 0 : i64, tpu.core_type = #tpu.core_type<tc>} {
    %c0 = arith.constant 0 : index
    %c0_0 = arith.constant 0 : index
    %0 = vector.load %arg2[%c0, %c0_0] : memref<128x160xf32, #tpu.memory_space<vmem>>, vector<64x96xf32>
    %c64 = arith.constant 64 : index
    %c0_1 = arith.constant 0 : index
    %1 = vector.load %arg2[%c64, %c0_1] : memref<128x160xf32, #tpu.memory_space<vmem>>, vector<32x96xf32>
    %c96 = arith.constant 96 : index
    %c0_2 = arith.constant 0 : index
    %2 = vector.load %arg2[%c96, %c0_2] : memref<128x160xf32, #tpu.memory_space<vmem>>, vector<32x160xf32>
    %c0_3 = arith.constant 0 : index
    %c0_4 = arith.constant 0 : index
    %3 = vector.load %arg3[%c0_3, %c0_4] : memref<3x160xf32, #tpu.memory_space<vmem>>, vector<3x160xf32>
    %4 = vector.extract_strided_slice %3 {offsets = [0, 0], sizes = [1, 96], strides = [1, 1]} : vector<3x160xf32> to vector<1x96xf32>
    %5 = vector.extract_strided_slice %3 {offsets = [1, 0], sizes = [1, 32], strides = [1, 1]} : vector<3x160xf32> to vector<1x32xf32>
    %6 = vector.extract_strided_slice %3 {offsets = [2, 0], sizes = [1, 160], strides = [1, 1]} : vector<3x160xf32> to vector<1x160xf32>
    %c0_5 = arith.constant 0 : index
    %c0_6 = arith.constant 0 : index
    %7 = vector.load %arg0[%c0_5, %c0_6] : memref<64x64xf32, #tpu.memory_space<vmem>>, vector<64x64xf32>
    %cst = arith.constant dense<0.000000e+00> : vector<64x96xf32>
    %8 = tpu.matmul %7, %0, %cst {dimension_numbers = #tpu.dot_dimension_numbers<[1], [0], [0], [1], [0, 0, 1, 1], [], []>} : vector<64x64xf32>, vector<64x96xf32>, vector<64x96xf32> -> vector<64x96xf32>
    %9 = vector.broadcast %4 : vector<1x96xf32> to vector<64x96xf32>
    %10 = arith.addf %8, %9 : vector<64x96xf32>
    %cst_7 = arith.constant 0.000000e+00 : f32
    %11 = vector.broadcast %cst_7 : f32 to vector<8x32xf32>
    %12 = vector.extract_strided_slice %10 {offsets = [0, 0], sizes = [8, 96], strides = [1, 1]} : vector<64x96xf32> to vector<8x96xf32>
    %cst_8 = arith.constant dense<0.000000e+00> : vector<8x96xf32>
    %13 = tpu.matmul %11, %1, %cst_8 {dimension_numbers = #tpu.dot_dimension_numbers<[1], [0], [0], [1], [0, 0, 1, 1], [], []>} : vector<8x32xf32>, vector<32x96xf32>, vector<8x96xf32> -> vector<8x96xf32>
    %14 = arith.addf %12, %13 : vector<8x96xf32>
    %15 = arith.negf %14 : vector<8x96xf32>
    %16 = math.exp %15 : vector<8x96xf32>
    %cst_9 = arith.constant 1.000000e+00 : f32
    %17 = vector.broadcast %cst_9 : f32 to vector<8x96xf32>
    %18 = arith.addf %17, %16 : vector<8x96xf32>
    %19 = arith.divf %17, %18 : vector<8x96xf32>
    %20 = vector.extract_strided_slice %19 {offsets = [0, 0], sizes = [8, 32], strides = [1, 1]} : vector<8x96xf32> to vector<8x32xf32>
    %21 = vector.extract_strided_slice %19 {offsets = [0, 32], sizes = [8, 32], strides = [1, 1]} : vector<8x96xf32> to vector<8x32xf32>
    %22 = vector.extract_strided_slice %12 {offsets = [0, 64], sizes = [8, 32], strides = [1, 1]} : vector<8x96xf32> to vector<8x32xf32>
    %23 = vector.extract_strided_slice %13 {offsets = [0, 64], sizes = [8, 32], strides = [1, 1]} : vector<8x96xf32> to vector<8x32xf32>
    %24 = vector.broadcast %5 : vector<1x32xf32> to vector<8x32xf32>
    %25 = arith.addf %23, %24 : vector<8x32xf32>
    %26 = arith.mulf %20, %25 : vector<8x32xf32>
    %27 = arith.addf %22, %26 : vector<8x32xf32>
    %28 = math.tanh %27 : vector<8x32xf32>
    %cst_10 = arith.constant 1.000000e+00 : f32
    %29 = vector.broadcast %cst_10 : f32 to vector<8x32xf32>
    %30 = arith.subf %29, %21 : vector<8x32xf32>
    %31 = arith.mulf %30, %28 : vector<8x32xf32>
    %32 = arith.mulf %21, %11 : vector<8x32xf32>
    %33 = arith.addf %31, %32 : vector<8x32xf32>
    %34 = vector.extract_strided_slice %10 {offsets = [8, 0], sizes = [8, 96], strides = [1, 1]} : vector<64x96xf32> to vector<8x96xf32>
    %cst_11 = arith.constant dense<0.000000e+00> : vector<8x96xf32>
    %35 = tpu.matmul %33, %1, %cst_11 {dimension_numbers = #tpu.dot_dimension_numbers<[1], [0], [0], [1], [0, 0, 1, 1], [], []>} : vector<8x32xf32>, vector<32x96xf32>, vector<8x96xf32> -> vector<8x96xf32>
    %36 = arith.addf %34, %35 : vector<8x96xf32>
    %37 = arith.negf %36 : vector<8x96xf32>
    %38 = math.exp %37 : vector<8x96xf32>
    %cst_12 = arith.constant 1.000000e+00 : f32
    %39 = vector.broadcast %cst_12 : f32 to vector<8x96xf32>
    %40 = arith.addf %39, %38 : vector<8x96xf32>
    %41 = arith.divf %39, %40 : vector<8x96xf32>
    %42 = vector.extract_strided_slice %41 {offsets = [0, 0], sizes = [8, 32], strides = [1, 1]} : vector<8x96xf32> to vector<8x32xf32>
    %43 = vector.extract_strided_slice %41 {offsets = [0, 32], sizes = [8, 32], strides = [1, 1]} : vector<8x96xf32> to vector<8x32xf32>
    %44 = vector.extract_strided_slice %34 {offsets = [0, 64], sizes = [8, 32], strides = [1, 1]} : vector<8x96xf32> to vector<8x32xf32>
    %45 = vector.extract_strided_slice %35 {offsets = [0, 64], sizes = [8, 32], strides = [1, 1]} : vector<8x96xf32> to vector<8x32xf32>
    %46 = vector.broadcast %5 : vector<1x32xf32> to vector<8x32xf32>
    %47 = arith.addf %45, %46 : vector<8x32xf32>
    %48 = arith.mulf %42, %47 : vector<8x32xf32>
    %49 = arith.addf %44, %48 : vector<8x32xf32>
    %50 = math.tanh %49 : vector<8x32xf32>
    %cst_13 = arith.constant 1.000000e+00 : f32
    %51 = vector.broadcast %cst_13 : f32 to vector<8x32xf32>
    %52 = arith.subf %51, %43 : vector<8x32xf32>
    %53 = arith.mulf %52, %50 : vector<8x32xf32>
    %54 = arith.mulf %43, %33 : vector<8x32xf32>
    %55 = arith.addf %53, %54 : vector<8x32xf32>
    %56 = vector.extract_strided_slice %10 {offsets = [16, 0], sizes = [8, 96], strides = [1, 1]} : vector<64x96xf32> to vector<8x96xf32>
    %cst_14 = arith.constant dense<0.000000e+00> : vector<8x96xf32>
    %57 = tpu.matmul %55, %1, %cst_14 {dimension_numbers = #tpu.dot_dimension_numbers<[1], [0], [0], [1], [0, 0, 1, 1], [], []>} : vector<8x32xf32>, vector<32x96xf32>, vector<8x96xf32> -> vector<8x96xf32>
    %58 = arith.addf %56, %57 : vector<8x96xf32>
    %59 = arith.negf %58 : vector<8x96xf32>
    %60 = math.exp %59 : vector<8x96xf32>
    %cst_15 = arith.constant 1.000000e+00 : f32
    %61 = vector.broadcast %cst_15 : f32 to vector<8x96xf32>
    %62 = arith.addf %61, %60 : vector<8x96xf32>
    %63 = arith.divf %61, %62 : vector<8x96xf32>
    %64 = vector.extract_strided_slice %63 {offsets = [0, 0], sizes = [8, 32], strides = [1, 1]} : vector<8x96xf32> to vector<8x32xf32>
    %65 = vector.extract_strided_slice %63 {offsets = [0, 32], sizes = [8, 32], strides = [1, 1]} : vector<8x96xf32> to vector<8x32xf32>
    %66 = vector.extract_strided_slice %56 {offsets = [0, 64], sizes = [8, 32], strides = [1, 1]} : vector<8x96xf32> to vector<8x32xf32>
    %67 = vector.extract_strided_slice %57 {offsets = [0, 64], sizes = [8, 32], strides = [1, 1]} : vector<8x96xf32> to vector<8x32xf32>
    %68 = vector.broadcast %5 : vector<1x32xf32> to vector<8x32xf32>
    %69 = arith.addf %67, %68 : vector<8x32xf32>
    %70 = arith.mulf %64, %69 : vector<8x32xf32>
    %71 = arith.addf %66, %70 : vector<8x32xf32>
    %72 = math.tanh %71 : vector<8x32xf32>
    %cst_16 = arith.constant 1.000000e+00 : f32
    %73 = vector.broadcast %cst_16 : f32 to vector<8x32xf32>
    %74 = arith.subf %73, %65 : vector<8x32xf32>
    %75 = arith.mulf %74, %72 : vector<8x32xf32>
    %76 = arith.mulf %65, %55 : vector<8x32xf32>
    %77 = arith.addf %75, %76 : vector<8x32xf32>
    %78 = vector.extract_strided_slice %10 {offsets = [24, 0], sizes = [8, 96], strides = [1, 1]} : vector<64x96xf32> to vector<8x96xf32>
    %cst_17 = arith.constant dense<0.000000e+00> : vector<8x96xf32>
    %79 = tpu.matmul %77, %1, %cst_17 {dimension_numbers = #tpu.dot_dimension_numbers<[1], [0], [0], [1], [0, 0, 1, 1], [], []>} : vector<8x32xf32>, vector<32x96xf32>, vector<8x96xf32> -> vector<8x96xf32>
    %80 = arith.addf %78, %79 : vector<8x96xf32>
    %81 = arith.negf %80 : vector<8x96xf32>
    %82 = math.exp %81 : vector<8x96xf32>
    %cst_18 = arith.constant 1.000000e+00 : f32
    %83 = vector.broadcast %cst_18 : f32 to vector<8x96xf32>
    %84 = arith.addf %83, %82 : vector<8x96xf32>
    %85 = arith.divf %83, %84 : vector<8x96xf32>
    %86 = vector.extract_strided_slice %85 {offsets = [0, 0], sizes = [8, 32], strides = [1, 1]} : vector<8x96xf32> to vector<8x32xf32>
    %87 = vector.extract_strided_slice %85 {offsets = [0, 32], sizes = [8, 32], strides = [1, 1]} : vector<8x96xf32> to vector<8x32xf32>
    %88 = vector.extract_strided_slice %78 {offsets = [0, 64], sizes = [8, 32], strides = [1, 1]} : vector<8x96xf32> to vector<8x32xf32>
    %89 = vector.extract_strided_slice %79 {offsets = [0, 64], sizes = [8, 32], strides = [1, 1]} : vector<8x96xf32> to vector<8x32xf32>
    %90 = vector.broadcast %5 : vector<1x32xf32> to vector<8x32xf32>
    %91 = arith.addf %89, %90 : vector<8x32xf32>
    %92 = arith.mulf %86, %91 : vector<8x32xf32>
    %93 = arith.addf %88, %92 : vector<8x32xf32>
    %94 = math.tanh %93 : vector<8x32xf32>
    %cst_19 = arith.constant 1.000000e+00 : f32
    %95 = vector.broadcast %cst_19 : f32 to vector<8x32xf32>
    %96 = arith.subf %95, %87 : vector<8x32xf32>
    %97 = arith.mulf %96, %94 : vector<8x32xf32>
    %98 = arith.mulf %87, %77 : vector<8x32xf32>
    %99 = arith.addf %97, %98 : vector<8x32xf32>
    %100 = vector.extract_strided_slice %10 {offsets = [32, 0], sizes = [8, 96], strides = [1, 1]} : vector<64x96xf32> to vector<8x96xf32>
    %cst_20 = arith.constant dense<0.000000e+00> : vector<8x96xf32>
    %101 = tpu.matmul %99, %1, %cst_20 {dimension_numbers = #tpu.dot_dimension_numbers<[1], [0], [0], [1], [0, 0, 1, 1], [], []>} : vector<8x32xf32>, vector<32x96xf32>, vector<8x96xf32> -> vector<8x96xf32>
    %102 = arith.addf %100, %101 : vector<8x96xf32>
    %103 = arith.negf %102 : vector<8x96xf32>
    %104 = math.exp %103 : vector<8x96xf32>
    %cst_21 = arith.constant 1.000000e+00 : f32
    %105 = vector.broadcast %cst_21 : f32 to vector<8x96xf32>
    %106 = arith.addf %105, %104 : vector<8x96xf32>
    %107 = arith.divf %105, %106 : vector<8x96xf32>
    %108 = vector.extract_strided_slice %107 {offsets = [0, 0], sizes = [8, 32], strides = [1, 1]} : vector<8x96xf32> to vector<8x32xf32>
    %109 = vector.extract_strided_slice %107 {offsets = [0, 32], sizes = [8, 32], strides = [1, 1]} : vector<8x96xf32> to vector<8x32xf32>
    %110 = vector.extract_strided_slice %100 {offsets = [0, 64], sizes = [8, 32], strides = [1, 1]} : vector<8x96xf32> to vector<8x32xf32>
    %111 = vector.extract_strided_slice %101 {offsets = [0, 64], sizes = [8, 32], strides = [1, 1]} : vector<8x96xf32> to vector<8x32xf32>
    %112 = vector.broadcast %5 : vector<1x32xf32> to vector<8x32xf32>
    %113 = arith.addf %111, %112 : vector<8x32xf32>
    %114 = arith.mulf %108, %113 : vector<8x32xf32>
    %115 = arith.addf %110, %114 : vector<8x32xf32>
    %116 = math.tanh %115 : vector<8x32xf32>
    %cst_22 = arith.constant 1.000000e+00 : f32
    %117 = vector.broadcast %cst_22 : f32 to vector<8x32xf32>
    %118 = arith.subf %117, %109 : vector<8x32xf32>
    %119 = arith.mulf %118, %116 : vector<8x32xf32>
    %120 = arith.mulf %109, %99 : vector<8x32xf32>
    %121 = arith.addf %119, %120 : vector<8x32xf32>
    %122 = vector.extract_strided_slice %10 {offsets = [40, 0], sizes = [8, 96], strides = [1, 1]} : vector<64x96xf32> to vector<8x96xf32>
    %cst_23 = arith.constant dense<0.000000e+00> : vector<8x96xf32>
    %123 = tpu.matmul %121, %1, %cst_23 {dimension_numbers = #tpu.dot_dimension_numbers<[1], [0], [0], [1], [0, 0, 1, 1], [], []>} : vector<8x32xf32>, vector<32x96xf32>, vector<8x96xf32> -> vector<8x96xf32>
    %124 = arith.addf %122, %123 : vector<8x96xf32>
    %125 = arith.negf %124 : vector<8x96xf32>
    %126 = math.exp %125 : vector<8x96xf32>
    %cst_24 = arith.constant 1.000000e+00 : f32
    %127 = vector.broadcast %cst_24 : f32 to vector<8x96xf32>
    %128 = arith.addf %127, %126 : vector<8x96xf32>
    %129 = arith.divf %127, %128 : vector<8x96xf32>
    %130 = vector.extract_strided_slice %129 {offsets = [0, 0], sizes = [8, 32], strides = [1, 1]} : vector<8x96xf32> to vector<8x32xf32>
    %131 = vector.extract_strided_slice %129 {offsets = [0, 32], sizes = [8, 32], strides = [1, 1]} : vector<8x96xf32> to vector<8x32xf32>
    %132 = vector.extract_strided_slice %122 {offsets = [0, 64], sizes = [8, 32], strides = [1, 1]} : vector<8x96xf32> to vector<8x32xf32>
    %133 = vector.extract_strided_slice %123 {offsets = [0, 64], sizes = [8, 32], strides = [1, 1]} : vector<8x96xf32> to vector<8x32xf32>
    %134 = vector.broadcast %5 : vector<1x32xf32> to vector<8x32xf32>
    %135 = arith.addf %133, %134 : vector<8x32xf32>
    %136 = arith.mulf %130, %135 : vector<8x32xf32>
    %137 = arith.addf %132, %136 : vector<8x32xf32>
    %138 = math.tanh %137 : vector<8x32xf32>
    %cst_25 = arith.constant 1.000000e+00 : f32
    %139 = vector.broadcast %cst_25 : f32 to vector<8x32xf32>
    %140 = arith.subf %139, %131 : vector<8x32xf32>
    %141 = arith.mulf %140, %138 : vector<8x32xf32>
    %142 = arith.mulf %131, %121 : vector<8x32xf32>
    %143 = arith.addf %141, %142 : vector<8x32xf32>
    %144 = vector.extract_strided_slice %10 {offsets = [48, 0], sizes = [8, 96], strides = [1, 1]} : vector<64x96xf32> to vector<8x96xf32>
    %cst_26 = arith.constant dense<0.000000e+00> : vector<8x96xf32>
    %145 = tpu.matmul %143, %1, %cst_26 {dimension_numbers = #tpu.dot_dimension_numbers<[1], [0], [0], [1], [0, 0, 1, 1], [], []>} : vector<8x32xf32>, vector<32x96xf32>, vector<8x96xf32> -> vector<8x96xf32>
    %146 = arith.addf %144, %145 : vector<8x96xf32>
    %147 = arith.negf %146 : vector<8x96xf32>
    %148 = math.exp %147 : vector<8x96xf32>
    %cst_27 = arith.constant 1.000000e+00 : f32
    %149 = vector.broadcast %cst_27 : f32 to vector<8x96xf32>
    %150 = arith.addf %149, %148 : vector<8x96xf32>
    %151 = arith.divf %149, %150 : vector<8x96xf32>
    %152 = vector.extract_strided_slice %151 {offsets = [0, 0], sizes = [8, 32], strides = [1, 1]} : vector<8x96xf32> to vector<8x32xf32>
    %153 = vector.extract_strided_slice %151 {offsets = [0, 32], sizes = [8, 32], strides = [1, 1]} : vector<8x96xf32> to vector<8x32xf32>
    %154 = vector.extract_strided_slice %144 {offsets = [0, 64], sizes = [8, 32], strides = [1, 1]} : vector<8x96xf32> to vector<8x32xf32>
    %155 = vector.extract_strided_slice %145 {offsets = [0, 64], sizes = [8, 32], strides = [1, 1]} : vector<8x96xf32> to vector<8x32xf32>
    %156 = vector.broadcast %5 : vector<1x32xf32> to vector<8x32xf32>
    %157 = arith.addf %155, %156 : vector<8x32xf32>
    %158 = arith.mulf %152, %157 : vector<8x32xf32>
    %159 = arith.addf %154, %158 : vector<8x32xf32>
    %160 = math.tanh %159 : vector<8x32xf32>
    %cst_28 = arith.constant 1.000000e+00 : f32
    %161 = vector.broadcast %cst_28 : f32 to vector<8x32xf32>
    %162 = arith.subf %161, %153 : vector<8x32xf32>
    %163 = arith.mulf %162, %160 : vector<8x32xf32>
    %164 = arith.mulf %153, %143 : vector<8x32xf32>
    %165 = arith.addf %163, %164 : vector<8x32xf32>
    %c0_29 = arith.constant 0 : index
    %c0_30 = arith.constant 0 : index
    %166 = vector.load %arg1[%c0_29, %c0_30] : memref<8x32xf32, #tpu.memory_space<vmem>>, vector<8x32xf32>
    %167 = arith.addf %165, %166 : vector<8x32xf32>
    %c56 = arith.constant 56 : index
    %c0_31 = arith.constant 0 : index
    %168 = vector.load %arg0[%c56, %c0_31] : memref<64x64xf32, #tpu.memory_space<vmem>>, vector<8x64xf32>
    %169 = vector.extract_strided_slice %10 {offsets = [56, 0], sizes = [8, 96], strides = [1, 1]} : vector<64x96xf32> to vector<8x96xf32>
    %cst_32 = arith.constant dense<0.000000e+00> : vector<8x96xf32>
    %170 = tpu.matmul %167, %1, %cst_32 {dimension_numbers = #tpu.dot_dimension_numbers<[1], [0], [0], [1], [0, 0, 1, 1], [], []>} : vector<8x32xf32>, vector<32x96xf32>, vector<8x96xf32> -> vector<8x96xf32>
    %171 = arith.addf %169, %170 : vector<8x96xf32>
    %172 = arith.negf %171 : vector<8x96xf32>
    %173 = math.exp %172 : vector<8x96xf32>
    %cst_33 = arith.constant 1.000000e+00 : f32
    %174 = vector.broadcast %cst_33 : f32 to vector<8x96xf32>
    %175 = arith.addf %174, %173 : vector<8x96xf32>
    %176 = arith.divf %174, %175 : vector<8x96xf32>
    %177 = vector.extract_strided_slice %176 {offsets = [0, 0], sizes = [8, 32], strides = [1, 1]} : vector<8x96xf32> to vector<8x32xf32>
    %178 = vector.extract_strided_slice %176 {offsets = [0, 32], sizes = [8, 32], strides = [1, 1]} : vector<8x96xf32> to vector<8x32xf32>
    %179 = vector.extract_strided_slice %169 {offsets = [0, 64], sizes = [8, 32], strides = [1, 1]} : vector<8x96xf32> to vector<8x32xf32>
    %180 = vector.extract_strided_slice %170 {offsets = [0, 64], sizes = [8, 32], strides = [1, 1]} : vector<8x96xf32> to vector<8x32xf32>
    %181 = vector.broadcast %5 : vector<1x32xf32> to vector<8x32xf32>
    %182 = arith.addf %180, %181 : vector<8x32xf32>
    %183 = arith.mulf %177, %182 : vector<8x32xf32>
    %184 = arith.addf %179, %183 : vector<8x32xf32>
    %185 = math.tanh %184 : vector<8x32xf32>
    %cst_34 = arith.constant 1.000000e+00 : f32
    %186 = vector.broadcast %cst_34 : f32 to vector<8x32xf32>
    %187 = arith.subf %186, %178 : vector<8x32xf32>
    %188 = arith.mulf %187, %185 : vector<8x32xf32>
    %189 = arith.mulf %178, %167 : vector<8x32xf32>
    %190 = arith.addf %188, %189 : vector<8x32xf32>
    %cst_35 = arith.constant dense<0.000000e+00> : vector<8x160xf32>
    %191 = tpu.matmul %190, %2, %cst_35 {dimension_numbers = #tpu.dot_dimension_numbers<[1], [0], [0], [1], [0, 0, 1, 1], [], []>} : vector<8x32xf32>, vector<32x160xf32>, vector<8x160xf32> -> vector<8x160xf32>
    %192 = vector.broadcast %6 : vector<1x160xf32> to vector<8x160xf32>
    %193 = arith.addf %191, %192 : vector<8x160xf32>
    %194 = vector.extract_strided_slice %193 {offsets = [0, 0], sizes = [8, 96], strides = [1, 1]} : vector<8x160xf32> to vector<8x96xf32>
    %195 = arith.addf %169, %194 : vector<8x96xf32>
    %196 = vector.extract_strided_slice %193 {offsets = [0, 96], sizes = [8, 64], strides = [1, 1]} : vector<8x160xf32> to vector<8x64xf32>
    %197 = arith.addf %168, %196 : vector<8x64xf32>
    %cst_36 = arith.constant dense<0.000000e+00> : vector<8x96xf32>
    %198 = tpu.matmul %190, %1, %cst_36 {dimension_numbers = #tpu.dot_dimension_numbers<[1], [0], [0], [1], [0, 0, 1, 1], [], []>} : vector<8x32xf32>, vector<32x96xf32>, vector<8x96xf32> -> vector<8x96xf32>
    %199 = arith.addf %195, %198 : vector<8x96xf32>
    %200 = arith.negf %199 : vector<8x96xf32>
    %201 = math.exp %200 : vector<8x96xf32>
    %cst_37 = arith.constant 1.000000e+00 : f32
    %202 = vector.broadcast %cst_37 : f32 to vector<8x96xf32>
    %203 = arith.addf %202, %201 : vector<8x96xf32>
    %204 = arith.divf %202, %203 : vector<8x96xf32>
    %205 = vector.extract_strided_slice %204 {offsets = [0, 0], sizes = [8, 32], strides = [1, 1]} : vector<8x96xf32> to vector<8x32xf32>
    %206 = vector.extract_strided_slice %204 {offsets = [0, 32], sizes = [8, 32], strides = [1, 1]} : vector<8x96xf32> to vector<8x32xf32>
    %207 = vector.extract_strided_slice %195 {offsets = [0, 64], sizes = [8, 32], strides = [1, 1]} : vector<8x96xf32> to vector<8x32xf32>
    %208 = vector.extract_strided_slice %198 {offsets = [0, 64], sizes = [8, 32], strides = [1, 1]} : vector<8x96xf32> to vector<8x32xf32>
    %209 = vector.broadcast %5 : vector<1x32xf32> to vector<8x32xf32>
    %210 = arith.addf %208, %209 : vector<8x32xf32>
    %211 = arith.mulf %205, %210 : vector<8x32xf32>
    %212 = arith.addf %207, %211 : vector<8x32xf32>
    %213 = math.tanh %212 : vector<8x32xf32>
    %cst_38 = arith.constant 1.000000e+00 : f32
    %214 = vector.broadcast %cst_38 : f32 to vector<8x32xf32>
    %215 = arith.subf %214, %206 : vector<8x32xf32>
    %216 = arith.mulf %215, %213 : vector<8x32xf32>
    %217 = arith.mulf %206, %190 : vector<8x32xf32>
    %218 = arith.addf %216, %217 : vector<8x32xf32>
    %cst_39 = arith.constant dense<0.000000e+00> : vector<8x160xf32>
    %219 = tpu.matmul %218, %2, %cst_39 {dimension_numbers = #tpu.dot_dimension_numbers<[1], [0], [0], [1], [0, 0, 1, 1], [], []>} : vector<8x32xf32>, vector<32x160xf32>, vector<8x160xf32> -> vector<8x160xf32>
    %220 = vector.broadcast %6 : vector<1x160xf32> to vector<8x160xf32>
    %221 = arith.addf %219, %220 : vector<8x160xf32>
    %222 = vector.extract_strided_slice %221 {offsets = [0, 0], sizes = [8, 96], strides = [1, 1]} : vector<8x160xf32> to vector<8x96xf32>
    %223 = arith.addf %195, %222 : vector<8x96xf32>
    %224 = vector.extract_strided_slice %221 {offsets = [0, 96], sizes = [8, 64], strides = [1, 1]} : vector<8x160xf32> to vector<8x64xf32>
    %225 = arith.addf %197, %224 : vector<8x64xf32>
    %cst_40 = arith.constant dense<0.000000e+00> : vector<8x96xf32>
    %226 = tpu.matmul %218, %1, %cst_40 {dimension_numbers = #tpu.dot_dimension_numbers<[1], [0], [0], [1], [0, 0, 1, 1], [], []>} : vector<8x32xf32>, vector<32x96xf32>, vector<8x96xf32> -> vector<8x96xf32>
    %227 = arith.addf %223, %226 : vector<8x96xf32>
    %228 = arith.negf %227 : vector<8x96xf32>
    %229 = math.exp %228 : vector<8x96xf32>
    %cst_41 = arith.constant 1.000000e+00 : f32
    %230 = vector.broadcast %cst_41 : f32 to vector<8x96xf32>
    %231 = arith.addf %230, %229 : vector<8x96xf32>
    %232 = arith.divf %230, %231 : vector<8x96xf32>
    %233 = vector.extract_strided_slice %232 {offsets = [0, 0], sizes = [8, 32], strides = [1, 1]} : vector<8x96xf32> to vector<8x32xf32>
    %234 = vector.extract_strided_slice %232 {offsets = [0, 32], sizes = [8, 32], strides = [1, 1]} : vector<8x96xf32> to vector<8x32xf32>
    %235 = vector.extract_strided_slice %223 {offsets = [0, 64], sizes = [8, 32], strides = [1, 1]} : vector<8x96xf32> to vector<8x32xf32>
    %236 = vector.extract_strided_slice %226 {offsets = [0, 64], sizes = [8, 32], strides = [1, 1]} : vector<8x96xf32> to vector<8x32xf32>
    %237 = vector.broadcast %5 : vector<1x32xf32> to vector<8x32xf32>
    %238 = arith.addf %236, %237 : vector<8x32xf32>
    %239 = arith.mulf %233, %238 : vector<8x32xf32>
    %240 = arith.addf %235, %239 : vector<8x32xf32>
    %241 = math.tanh %240 : vector<8x32xf32>
    %cst_42 = arith.constant 1.000000e+00 : f32
    %242 = vector.broadcast %cst_42 : f32 to vector<8x32xf32>
    %243 = arith.subf %242, %234 : vector<8x32xf32>
    %244 = arith.mulf %243, %241 : vector<8x32xf32>
    %245 = arith.mulf %234, %218 : vector<8x32xf32>
    %246 = arith.addf %244, %245 : vector<8x32xf32>
    %cst_43 = arith.constant dense<0.000000e+00> : vector<8x160xf32>
    %247 = tpu.matmul %246, %2, %cst_43 {dimension_numbers = #tpu.dot_dimension_numbers<[1], [0], [0], [1], [0, 0, 1, 1], [], []>} : vector<8x32xf32>, vector<32x160xf32>, vector<8x160xf32> -> vector<8x160xf32>
    %248 = vector.broadcast %6 : vector<1x160xf32> to vector<8x160xf32>
    %249 = arith.addf %247, %248 : vector<8x160xf32>
    %250 = vector.extract_strided_slice %249 {offsets = [0, 0], sizes = [8, 96], strides = [1, 1]} : vector<8x160xf32> to vector<8x96xf32>
    %251 = arith.addf %223, %250 : vector<8x96xf32>
    %252 = vector.extract_strided_slice %249 {offsets = [0, 96], sizes = [8, 64], strides = [1, 1]} : vector<8x160xf32> to vector<8x64xf32>
    %253 = arith.addf %225, %252 : vector<8x64xf32>
    %cst_44 = arith.constant dense<0.000000e+00> : vector<8x96xf32>
    %254 = tpu.matmul %246, %1, %cst_44 {dimension_numbers = #tpu.dot_dimension_numbers<[1], [0], [0], [1], [0, 0, 1, 1], [], []>} : vector<8x32xf32>, vector<32x96xf32>, vector<8x96xf32> -> vector<8x96xf32>
    %255 = arith.addf %251, %254 : vector<8x96xf32>
    %256 = arith.negf %255 : vector<8x96xf32>
    %257 = math.exp %256 : vector<8x96xf32>
    %cst_45 = arith.constant 1.000000e+00 : f32
    %258 = vector.broadcast %cst_45 : f32 to vector<8x96xf32>
    %259 = arith.addf %258, %257 : vector<8x96xf32>
    %260 = arith.divf %258, %259 : vector<8x96xf32>
    %261 = vector.extract_strided_slice %260 {offsets = [0, 0], sizes = [8, 32], strides = [1, 1]} : vector<8x96xf32> to vector<8x32xf32>
    %262 = vector.extract_strided_slice %260 {offsets = [0, 32], sizes = [8, 32], strides = [1, 1]} : vector<8x96xf32> to vector<8x32xf32>
    %263 = vector.extract_strided_slice %251 {offsets = [0, 64], sizes = [8, 32], strides = [1, 1]} : vector<8x96xf32> to vector<8x32xf32>
    %264 = vector.extract_strided_slice %254 {offsets = [0, 64], sizes = [8, 32], strides = [1, 1]} : vector<8x96xf32> to vector<8x32xf32>
    %265 = vector.broadcast %5 : vector<1x32xf32> to vector<8x32xf32>
    %266 = arith.addf %264, %265 : vector<8x32xf32>
    %267 = arith.mulf %261, %266 : vector<8x32xf32>
    %268 = arith.addf %263, %267 : vector<8x32xf32>
    %269 = math.tanh %268 : vector<8x32xf32>
    %cst_46 = arith.constant 1.000000e+00 : f32
    %270 = vector.broadcast %cst_46 : f32 to vector<8x32xf32>
    %271 = arith.subf %270, %262 : vector<8x32xf32>
    %272 = arith.mulf %271, %269 : vector<8x32xf32>
    %273 = arith.mulf %262, %246 : vector<8x32xf32>
    %274 = arith.addf %272, %273 : vector<8x32xf32>
    %cst_47 = arith.constant dense<0.000000e+00> : vector<8x160xf32>
    %275 = tpu.matmul %274, %2, %cst_47 {dimension_numbers = #tpu.dot_dimension_numbers<[1], [0], [0], [1], [0, 0, 1, 1], [], []>} : vector<8x32xf32>, vector<32x160xf32>, vector<8x160xf32> -> vector<8x160xf32>
    %276 = vector.broadcast %6 : vector<1x160xf32> to vector<8x160xf32>
    %277 = arith.addf %275, %276 : vector<8x160xf32>
    %278 = vector.extract_strided_slice %277 {offsets = [0, 0], sizes = [8, 96], strides = [1, 1]} : vector<8x160xf32> to vector<8x96xf32>
    %279 = arith.addf %251, %278 : vector<8x96xf32>
    %280 = vector.extract_strided_slice %277 {offsets = [0, 96], sizes = [8, 64], strides = [1, 1]} : vector<8x160xf32> to vector<8x64xf32>
    %281 = arith.addf %253, %280 : vector<8x64xf32>
    %cst_48 = arith.constant dense<0.000000e+00> : vector<8x96xf32>
    %282 = tpu.matmul %274, %1, %cst_48 {dimension_numbers = #tpu.dot_dimension_numbers<[1], [0], [0], [1], [0, 0, 1, 1], [], []>} : vector<8x32xf32>, vector<32x96xf32>, vector<8x96xf32> -> vector<8x96xf32>
    %283 = arith.addf %279, %282 : vector<8x96xf32>
    %284 = arith.negf %283 : vector<8x96xf32>
    %285 = math.exp %284 : vector<8x96xf32>
    %cst_49 = arith.constant 1.000000e+00 : f32
    %286 = vector.broadcast %cst_49 : f32 to vector<8x96xf32>
    %287 = arith.addf %286, %285 : vector<8x96xf32>
    %288 = arith.divf %286, %287 : vector<8x96xf32>
    %289 = vector.extract_strided_slice %288 {offsets = [0, 0], sizes = [8, 32], strides = [1, 1]} : vector<8x96xf32> to vector<8x32xf32>
    %290 = vector.extract_strided_slice %288 {offsets = [0, 32], sizes = [8, 32], strides = [1, 1]} : vector<8x96xf32> to vector<8x32xf32>
    %291 = vector.extract_strided_slice %279 {offsets = [0, 64], sizes = [8, 32], strides = [1, 1]} : vector<8x96xf32> to vector<8x32xf32>
    %292 = vector.extract_strided_slice %282 {offsets = [0, 64], sizes = [8, 32], strides = [1, 1]} : vector<8x96xf32> to vector<8x32xf32>
    %293 = vector.broadcast %5 : vector<1x32xf32> to vector<8x32xf32>
    %294 = arith.addf %292, %293 : vector<8x32xf32>
    %295 = arith.mulf %289, %294 : vector<8x32xf32>
    %296 = arith.addf %291, %295 : vector<8x32xf32>
    %297 = math.tanh %296 : vector<8x32xf32>
    %cst_50 = arith.constant 1.000000e+00 : f32
    %298 = vector.broadcast %cst_50 : f32 to vector<8x32xf32>
    %299 = arith.subf %298, %290 : vector<8x32xf32>
    %300 = arith.mulf %299, %297 : vector<8x32xf32>
    %301 = arith.mulf %290, %274 : vector<8x32xf32>
    %302 = arith.addf %300, %301 : vector<8x32xf32>
    %cst_51 = arith.constant dense<0.000000e+00> : vector<8x160xf32>
    %303 = tpu.matmul %302, %2, %cst_51 {dimension_numbers = #tpu.dot_dimension_numbers<[1], [0], [0], [1], [0, 0, 1, 1], [], []>} : vector<8x32xf32>, vector<32x160xf32>, vector<8x160xf32> -> vector<8x160xf32>
    %304 = vector.broadcast %6 : vector<1x160xf32> to vector<8x160xf32>
    %305 = arith.addf %303, %304 : vector<8x160xf32>
    %306 = vector.extract_strided_slice %305 {offsets = [0, 0], sizes = [8, 96], strides = [1, 1]} : vector<8x160xf32> to vector<8x96xf32>
    %307 = arith.addf %279, %306 : vector<8x96xf32>
    %308 = vector.extract_strided_slice %305 {offsets = [0, 96], sizes = [8, 64], strides = [1, 1]} : vector<8x160xf32> to vector<8x64xf32>
    %309 = arith.addf %281, %308 : vector<8x64xf32>
    %cst_52 = arith.constant dense<0.000000e+00> : vector<8x96xf32>
    %310 = tpu.matmul %302, %1, %cst_52 {dimension_numbers = #tpu.dot_dimension_numbers<[1], [0], [0], [1], [0, 0, 1, 1], [], []>} : vector<8x32xf32>, vector<32x96xf32>, vector<8x96xf32> -> vector<8x96xf32>
    %311 = arith.addf %307, %310 : vector<8x96xf32>
    %312 = arith.negf %311 : vector<8x96xf32>
    %313 = math.exp %312 : vector<8x96xf32>
    %cst_53 = arith.constant 1.000000e+00 : f32
    %314 = vector.broadcast %cst_53 : f32 to vector<8x96xf32>
    %315 = arith.addf %314, %313 : vector<8x96xf32>
    %316 = arith.divf %314, %315 : vector<8x96xf32>
    %317 = vector.extract_strided_slice %316 {offsets = [0, 0], sizes = [8, 32], strides = [1, 1]} : vector<8x96xf32> to vector<8x32xf32>
    %318 = vector.extract_strided_slice %316 {offsets = [0, 32], sizes = [8, 32], strides = [1, 1]} : vector<8x96xf32> to vector<8x32xf32>
    %319 = vector.extract_strided_slice %307 {offsets = [0, 64], sizes = [8, 32], strides = [1, 1]} : vector<8x96xf32> to vector<8x32xf32>
    %320 = vector.extract_strided_slice %310 {offsets = [0, 64], sizes = [8, 32], strides = [1, 1]} : vector<8x96xf32> to vector<8x32xf32>
    %321 = vector.broadcast %5 : vector<1x32xf32> to vector<8x32xf32>
    %322 = arith.addf %320, %321 : vector<8x32xf32>
    %323 = arith.mulf %317, %322 : vector<8x32xf32>
    %324 = arith.addf %319, %323 : vector<8x32xf32>
    %325 = math.tanh %324 : vector<8x32xf32>
    %cst_54 = arith.constant 1.000000e+00 : f32
    %326 = vector.broadcast %cst_54 : f32 to vector<8x32xf32>
    %327 = arith.subf %326, %318 : vector<8x32xf32>
    %328 = arith.mulf %327, %325 : vector<8x32xf32>
    %329 = arith.mulf %318, %302 : vector<8x32xf32>
    %330 = arith.addf %328, %329 : vector<8x32xf32>
    %cst_55 = arith.constant dense<0.000000e+00> : vector<8x160xf32>
    %331 = tpu.matmul %330, %2, %cst_55 {dimension_numbers = #tpu.dot_dimension_numbers<[1], [0], [0], [1], [0, 0, 1, 1], [], []>} : vector<8x32xf32>, vector<32x160xf32>, vector<8x160xf32> -> vector<8x160xf32>
    %332 = vector.broadcast %6 : vector<1x160xf32> to vector<8x160xf32>
    %333 = arith.addf %331, %332 : vector<8x160xf32>
    %334 = vector.extract_strided_slice %333 {offsets = [0, 0], sizes = [8, 96], strides = [1, 1]} : vector<8x160xf32> to vector<8x96xf32>
    %335 = arith.addf %307, %334 : vector<8x96xf32>
    %336 = vector.extract_strided_slice %333 {offsets = [0, 96], sizes = [8, 64], strides = [1, 1]} : vector<8x160xf32> to vector<8x64xf32>
    %337 = arith.addf %309, %336 : vector<8x64xf32>
    %cst_56 = arith.constant dense<0.000000e+00> : vector<8x96xf32>
    %338 = tpu.matmul %330, %1, %cst_56 {dimension_numbers = #tpu.dot_dimension_numbers<[1], [0], [0], [1], [0, 0, 1, 1], [], []>} : vector<8x32xf32>, vector<32x96xf32>, vector<8x96xf32> -> vector<8x96xf32>
    %339 = arith.addf %335, %338 : vector<8x96xf32>
    %340 = arith.negf %339 : vector<8x96xf32>
    %341 = math.exp %340 : vector<8x96xf32>
    %cst_57 = arith.constant 1.000000e+00 : f32
    %342 = vector.broadcast %cst_57 : f32 to vector<8x96xf32>
    %343 = arith.addf %342, %341 : vector<8x96xf32>
    %344 = arith.divf %342, %343 : vector<8x96xf32>
    %345 = vector.extract_strided_slice %344 {offsets = [0, 0], sizes = [8, 32], strides = [1, 1]} : vector<8x96xf32> to vector<8x32xf32>
    %346 = vector.extract_strided_slice %344 {offsets = [0, 32], sizes = [8, 32], strides = [1, 1]} : vector<8x96xf32> to vector<8x32xf32>
    %347 = vector.extract_strided_slice %335 {offsets = [0, 64], sizes = [8, 32], strides = [1, 1]} : vector<8x96xf32> to vector<8x32xf32>
    %348 = vector.extract_strided_slice %338 {offsets = [0, 64], sizes = [8, 32], strides = [1, 1]} : vector<8x96xf32> to vector<8x32xf32>
    %349 = vector.broadcast %5 : vector<1x32xf32> to vector<8x32xf32>
    %350 = arith.addf %348, %349 : vector<8x32xf32>
    %351 = arith.mulf %345, %350 : vector<8x32xf32>
    %352 = arith.addf %347, %351 : vector<8x32xf32>
    %353 = math.tanh %352 : vector<8x32xf32>
    %cst_58 = arith.constant 1.000000e+00 : f32
    %354 = vector.broadcast %cst_58 : f32 to vector<8x32xf32>
    %355 = arith.subf %354, %346 : vector<8x32xf32>
    %356 = arith.mulf %355, %353 : vector<8x32xf32>
    %357 = arith.mulf %346, %330 : vector<8x32xf32>
    %358 = arith.addf %356, %357 : vector<8x32xf32>
    %cst_59 = arith.constant dense<0.000000e+00> : vector<8x160xf32>
    %359 = tpu.matmul %358, %2, %cst_59 {dimension_numbers = #tpu.dot_dimension_numbers<[1], [0], [0], [1], [0, 0, 1, 1], [], []>} : vector<8x32xf32>, vector<32x160xf32>, vector<8x160xf32> -> vector<8x160xf32>
    %360 = vector.broadcast %6 : vector<1x160xf32> to vector<8x160xf32>
    %361 = arith.addf %359, %360 : vector<8x160xf32>
    %362 = vector.extract_strided_slice %361 {offsets = [0, 0], sizes = [8, 96], strides = [1, 1]} : vector<8x160xf32> to vector<8x96xf32>
    %363 = arith.addf %335, %362 : vector<8x96xf32>
    %364 = vector.extract_strided_slice %361 {offsets = [0, 96], sizes = [8, 64], strides = [1, 1]} : vector<8x160xf32> to vector<8x64xf32>
    %365 = arith.addf %337, %364 : vector<8x64xf32>
    %cst_60 = arith.constant dense<0.000000e+00> : vector<8x96xf32>
    %366 = tpu.matmul %358, %1, %cst_60 {dimension_numbers = #tpu.dot_dimension_numbers<[1], [0], [0], [1], [0, 0, 1, 1], [], []>} : vector<8x32xf32>, vector<32x96xf32>, vector<8x96xf32> -> vector<8x96xf32>
    %367 = arith.addf %363, %366 : vector<8x96xf32>
    %368 = arith.negf %367 : vector<8x96xf32>
    %369 = math.exp %368 : vector<8x96xf32>
    %cst_61 = arith.constant 1.000000e+00 : f32
    %370 = vector.broadcast %cst_61 : f32 to vector<8x96xf32>
    %371 = arith.addf %370, %369 : vector<8x96xf32>
    %372 = arith.divf %370, %371 : vector<8x96xf32>
    %373 = vector.extract_strided_slice %372 {offsets = [0, 0], sizes = [8, 32], strides = [1, 1]} : vector<8x96xf32> to vector<8x32xf32>
    %374 = vector.extract_strided_slice %372 {offsets = [0, 32], sizes = [8, 32], strides = [1, 1]} : vector<8x96xf32> to vector<8x32xf32>
    %375 = vector.extract_strided_slice %363 {offsets = [0, 64], sizes = [8, 32], strides = [1, 1]} : vector<8x96xf32> to vector<8x32xf32>
    %376 = vector.extract_strided_slice %366 {offsets = [0, 64], sizes = [8, 32], strides = [1, 1]} : vector<8x96xf32> to vector<8x32xf32>
    %377 = vector.broadcast %5 : vector<1x32xf32> to vector<8x32xf32>
    %378 = arith.addf %376, %377 : vector<8x32xf32>
    %379 = arith.mulf %373, %378 : vector<8x32xf32>
    %380 = arith.addf %375, %379 : vector<8x32xf32>
    %381 = math.tanh %380 : vector<8x32xf32>
    %cst_62 = arith.constant 1.000000e+00 : f32
    %382 = vector.broadcast %cst_62 : f32 to vector<8x32xf32>
    %383 = arith.subf %382, %374 : vector<8x32xf32>
    %384 = arith.mulf %383, %381 : vector<8x32xf32>
    %385 = arith.mulf %374, %358 : vector<8x32xf32>
    %386 = arith.addf %384, %385 : vector<8x32xf32>
    %cst_63 = arith.constant dense<0.000000e+00> : vector<8x160xf32>
    %387 = tpu.matmul %386, %2, %cst_63 {dimension_numbers = #tpu.dot_dimension_numbers<[1], [0], [0], [1], [0, 0, 1, 1], [], []>} : vector<8x32xf32>, vector<32x160xf32>, vector<8x160xf32> -> vector<8x160xf32>
    %388 = vector.broadcast %6 : vector<1x160xf32> to vector<8x160xf32>
    %389 = arith.addf %387, %388 : vector<8x160xf32>
    %390 = vector.extract_strided_slice %389 {offsets = [0, 96], sizes = [8, 64], strides = [1, 1]} : vector<8x160xf32> to vector<8x64xf32>
    %391 = arith.addf %365, %390 : vector<8x64xf32>
    %392 = vector.shape_cast %197 : vector<8x64xf32> to vector<1x8x64xf32>
    %393 = vector.shape_cast %225 : vector<8x64xf32> to vector<1x8x64xf32>
    %394 = vector.shape_cast %253 : vector<8x64xf32> to vector<1x8x64xf32>
    %395 = vector.shape_cast %281 : vector<8x64xf32> to vector<1x8x64xf32>
    %396 = vector.shape_cast %309 : vector<8x64xf32> to vector<1x8x64xf32>
    %397 = vector.shape_cast %337 : vector<8x64xf32> to vector<1x8x64xf32>
    %398 = vector.shape_cast %365 : vector<8x64xf32> to vector<1x8x64xf32>
    %399 = vector.shape_cast %391 : vector<8x64xf32> to vector<1x8x64xf32>
    %400 = tpu.concatenate %392, %393, %394, %395, %396, %397, %398, %399 in 0 : vector<1x8x64xf32>, vector<1x8x64xf32>, vector<1x8x64xf32>, vector<1x8x64xf32>, vector<1x8x64xf32>, vector<1x8x64xf32>, vector<1x8x64xf32>, vector<1x8x64xf32> -> vector<8x8x64xf32>
    %c0_64 = arith.constant 0 : index
    %c0_65 = arith.constant 0 : index
    %c0_66 = arith.constant 0 : index
    %401 = vector.load %arg4[%c0_64, %c0_65, %c0_66] : memref<8x8x64xf32, #tpu.memory_space<vmem>>, vector<8x8x64xf32>
    tpu.vector_store %arg4[%c0_64, %c0_65, %c0_66], %400 {strides = array<i32>} : memref<8x8x64xf32, #tpu.memory_space<vmem>>, vector<8x8x64xf32>,
    return
  }
}

</mosaic_0001>

<llo_original>
// kernel: generator_rnn_forward.1
$region0: #{generator_rnn_forward.1}
  #allocation0 [shape = 'u32[]', space=smem, size = 0x4, offset = 0x4, fixed_abs, tag = 'smem constant byte address 0x4 - core index']
  #allocation1 [shape = 'u32[72,128]{1,0:T(1,128)}', space=vmem, size = 0x9000, scoped, tag = 'internal scratch']
  %s0 = inlined_call_operand.vmem [shape: f32[64,64], index: 0, kind: input, shape index: {}]
  %s1 = inlined_call_operand.vmem [shape: f32[8,32], index: 1, kind: input, shape index: {}]
  %s2 = inlined_call_operand.vmem [shape: f32[128,160], index: 2, kind: input, shape index: {}]
  %s3 = inlined_call_operand.vmem [shape: f32[3,160], index: 3, kind: input, shape index: {}]
  %s4 = inlined_call_operand.vmem [shape: f32[8,8,64], index: 4, kind: output, shape index: {}]
  %s5 = sld [smem:[#allocation0]]
  $region26: #{generator_rnn_forward.1} parent=0
    _
  %s7 = ssub.s32 1, %s5
  %s8 = scalar_select 0, %s7, %s5
  // Predicated region
  $region2: #{generator_rnn_forward.1} parent=0 // pred_check
    _
  $region3: #{generator_rnn_forward.1} parent=0 // pred_check_branch
    %10 = sbr.rel (0) target = $region5
  $region4: #{generator_rnn_forward.1} parent=0 // pred_region
    _
  $region5: #{generator_rnn_forward.1} parent=0 // pred_fallthru
    _
  // Predicated region
  $region6: #{generator_rnn_forward.1} parent=0 // pred_check
    _
  $region7: #{generator_rnn_forward.1} parent=0 // pred_check_branch
    %12 = sbr.rel (0) target = $region9
  $region8: #{generator_rnn_forward.1} parent=0 // pred_region
    _
  $region9: #{generator_rnn_forward.1} parent=0 // pred_fallthru
    _
  // Predicated region
  $region10: #{generator_rnn_forward.1} parent=0 // pred_check
    _
  $region11: #{generator_rnn_forward.1} parent=0 // pred_check_branch
    %14 = sbr.rel (0) target = $region13
  $region12: #{generator_rnn_forward.1} parent=0 // pred_region
    _
  $region13: #{generator_rnn_forward.1} parent=0 // pred_fallthru
    _
  // Predicated region
  $region14: #{generator_rnn_forward.1} parent=0 // pred_check
    _
  $region15: #{generator_rnn_forward.1} parent=0 // pred_check_branch
    %16 = sbr.rel (0) target = $region17
  $region16: #{generator_rnn_forward.1} parent=0 // pred_region
    _
  $region17: #{generator_rnn_forward.1} parent=0 // pred_fallthru
    _
  %v17 = vld [vmem:[%s2] sm:$0xff]
  %v18 = vld [vmem:[%s2 + $0x10] sm:$0xff]
  %v19 = vld [vmem:[%s2 + $0x20] sm:$0xff]
  %v20 = vld [vmem:[%s2 + $0x30] sm:$0xff]
  %v21 = vld [vmem:[%s2 + $0x40] sm:$0xff]
  %v22 = vld [vmem:[%s2 + $0x50] sm:$0xff]
  %v23 = vld [vmem:[%s2 + $0x60] sm:$0xff]
  %v24 = vld [vmem:[%s2 + $0x70] sm:$0xff]
  %v25 = vld [vmem:[%s2 + $0x80] sm:$0xff]
  %v26 = vld [vmem:[%s2 + $0x90] sm:$0xff]
  %v27 = vld [vmem:[%s2 + $0xa0] sm:$0xff]
  %v28 = vld [vmem:[%s2 + $0xb0] sm:$0xff]
  %v29 = vld [vmem:[%s2 + $0xc0] sm:$0xff]
  %v30 = vld [vmem:[%s2 + $0xc8] sm:$0xff]
  %v31 = vld [vmem:[%s2 + $0xd0] sm:$0xff]
  %v32 = vld [vmem:[%s2 + $0xd8] sm:$0xff]
  %v33 = vld [vmem:[%s2 + $0xe0] sm:$0xff]
  %v34 = vld [vmem:[%s2 + $0xe8] sm:$0xff]
  %v35 = vld [vmem:[%s2 + $0xf0] sm:$0xff]
  %v36 = vld [vmem:[%s2 + $0xf8] sm:$0xff]
  %v37 = vld [vmem:[%s3] sm:$0x77]
  %v38 = vld [vmem:[%s0] sm:$0xff]
  %v39 = vld [vmem:[%s0 + $0x8] sm:$0xff]
  %v40 = vld [vmem:[%s0 + $0x10] sm:$0xff]
  %v41 = vld [vmem:[%s0 + $0x18] sm:$0xff]
  %v42 = vld [vmem:[%s0 + $0x20] sm:$0xff]
  %v43 = vld [vmem:[%s0 + $0x28] sm:$0xff]
  %v44 = vld [vmem:[%s0 + $0x30] sm:$0xff]
  %v45 = vld [vmem:[%s0 + $0x38] sm:$0xff]
  %v46 = vperm.slane %v37, 0
  %vm47 = vcmask 523264
  %v49 = vsel %vm47, %v38, 0
  %v52 = vsel %vm47, %v39, 0
  %v55 = vsel %vm47, %v40, 0
  %v58 = vsel %vm47, %v41, 0
  %v61 = vsel %vm47, %v42, 0
  %v64 = vsel %vm47, %v43, 0
  %v67 = vsel %vm47, %v44, 0
  %v70 = vsel %vm47, %v45, 0
  %72 = vmatpush.msra.mxu0 0.0
  %73 = vmatpush.msra.mxu0 0.0
  %74 = vmatpush.msra.mxu0 0.0
  %75 = vmatpush.msra.mxu0 0.0
  %76 = vmatpush.msra.mxu0 0.0
  %77 = vmatpush.msra.mxu0 0.0
  %78 = vmatpush.msra.mxu0 0.0
  %79 = vmatpush.msra.mxu0 0.0
  %80 = vmatpush.msra.mxu0 %v24
  %81 = vmatpush.msra.mxu0 %v23
  %82 = vmatpush.msra.mxu0 %v22
  %83 = vmatpush.msra.mxu0 %v21
  %84 = vmatpush.msra.mxu0 %v20
  %85 = vmatpush.msra.mxu0 %v19
  %86 = vmatpush.msra.mxu0 %v18
  %87 = vmatpush.msra.mxu0 %v17
  %88 = vmatmul.f32.gmra.mxu0 %v49
  %v89 = vpop.f32.mrf.mxu0
  %v90 = vadd.f32 %v46, %v89
  %91 = vmatmul.f32.gmra.mxu0 %v52
  %v92 = vpop.f32.mrf.mxu0
  %v93 = vadd.f32 %v46, %v92
  %94 = vmatmul.f32.gmra.mxu0 %v55
  %v95 = vpop.f32.mrf.mxu0
  %v96 = vadd.f32 %v46, %v95
  %97 = vmatmul.f32.gmra.mxu0 %v58
  %v98 = vpop.f32.mrf.mxu0
  %v99 = vadd.f32 %v46, %v98
  %100 = vmatmul.f32.gmra.mxu0 %v61
  %v101 = vpop.f32.mrf.mxu0
  %v102 = vadd.f32 %v46, %v101
  %103 = vmatmul.f32.gmra.mxu0 %v64
  %v104 = vpop.f32.mrf.mxu0
  %v105 = vadd.f32 %v46, %v104
  %106 = vmatmul.f32.gmra.mxu0 %v67
  %v107 = vpop.f32.mrf.mxu0
  %v108 = vadd.f32 %v46, %v107
  %109 = vmatmul.f32.gmra.mxu0 %v70
  %v110 = vpop.f32.mrf.mxu0
  %v111 = vadd.f32 %v46, %v110
  %112 = vdwg.mxu0
  %vm113 = vcmask 261120
  %v115 = vsel %vm113, 0.0, 0
  %117 = vmatpush.msra.mxu0 0.0
  %118 = vmatpush.msra.mxu0 0.0
  %119 = vmatpush.msra.mxu0 0.0
  %120 = vmatpush.msra.mxu0 0.0
  %121 = vmatpush.msra.mxu0 0.0
  %122 = vmatpush.msra.mxu0 0.0
  %123 = vmatpush.msra.mxu0 0.0
  %124 = vmatpush.msra.mxu0 0.0
  %125 = vmatpush.msra.mxu0 0.0
  %126 = vmatpush.msra.mxu0 0.0
  %127 = vmatpush.msra.mxu0 0.0
  %128 = vmatpush.msra.mxu0 0.0
  %129 = vmatpush.msra.mxu0 %v28
  %130 = vmatpush.msra.mxu0 %v27
  %131 = vmatpush.msra.mxu0 %v26
  %132 = vmatpush.msra.mxu0 %v25
  %133 = vmatmul.f32.gmra.mxu0 %v115
  %v134 = vpop.f32.mrf.mxu0
  %v135 = vadd.f32 0.0, %v134
  %136 = vdwg.mxu0
  %v137 = vadd.f32 %v90, %v135
  %v138 = vxor.u32 %v137, 2147483648
  %v139 = vmul.f32 %v138, 1.442695
  %v140 = vpow.pop %v139
  %v141 = vadd.f32 %v140, 1.0
  %v142 = vrcp.pop %v141
  %v143 = vmul.f32 %v141, %v142
  %v144 = vsub.f32 1.0, %v143
  %v145 = vmul.f32 %v142, %v144
  %v146 = vadd.f32 %v142, %v145
  %vm147 = vweird.f32 %v141
  %vm148 = vweird.f32 %v142
  %vm149 = vmor %vm147, %vm148
  %v150 = vsel %vm149, %v142, %v146
  %v151 = vand.u32 2147483647, %v141
  %vm152 = vcmp.eq.f32.partialorder %v151, 8.507059e+37
  %v153 = vand.u32 %v141, 2147483648
  %v154 = vor.u32 1.1754944e-38, %v153
  %v155 = vsel %vm152, %v154, %v150
  %v156 = vmul.f32 1.0, %v155
  %v157 = vperm.slane %v37, 1
  %159 = vrot.lane.b32.xlu0 %v157, 64
  %v160 = vpop.permute.xlu0 %159
  %v162 = vadd.f32 %v135, %v160
  %164 = vrot.lane.b32.xlu0 %v162, 64
  %v165 = vpop.permute.xlu0 %164
  %v167 = vmul.f32 %v156, %v165
  %169 = vrot.lane.b32.xlu0 %v167, 64
  %v170 = vpop.permute.xlu0 %169
  %v172 = vadd.f32 %v90, %v170
  %v173 = vtanh.pop %v172
  %v174 = vsub.f32 1.0, %v156
  %176 = vrot.lane.b32.xlu0 %v173, 96
  %v177 = vpop.permute.xlu0 %176
  %v179 = vmul.f32 %v174, %v177
  %v180 = vmul.f32 %v156, 0.0
  %v181 = vadd.f32 %v179, %v180
  %183 = vrot.lane.b32.xlu0 %v181, 96
  %v184 = vpop.permute.xlu0 %183
  %v185 = vsel %vm113, %v184, 0
  %187 = vmatpush.msra.mxu0 0.0
  %188 = vmatpush.msra.mxu0 0.0
  %189 = vmatpush.msra.mxu0 0.0
  %190 = vmatpush.msra.mxu0 0.0
  %191 = vmatpush.msra.mxu0 0.0
  %192 = vmatpush.msra.mxu0 0.0
  %193 = vmatpush.msra.mxu0 0.0
  %194 = vmatpush.msra.mxu0 0.0
  %195 = vmatpush.msra.mxu0 0.0
  %196 = vmatpush.msra.mxu0 0.0
  %197 = vmatpush.msra.mxu0 0.0
  %198 = vmatpush.msra.mxu0 0.0
  %199 = vmatpush.msra.mxu0 %v28
  %200 = vmatpush.msra.mxu0 %v27
  %201 = vmatpush.msra.mxu0 %v26
  %202 = vmatpush.msra.mxu0 %v25
  %203 = vmatmul.f32.gmra.mxu0 %v185
  %v204 = vpop.f32.mrf.mxu0
  %v205 = vadd.f32 0.0, %v204
  %206 = vdwg.mxu0
  %v207 = vadd.f32 %v93, %v205
  %v208 = vxor.u32 %v207, 2147483648
  %v209 = vmul.f32 %v208, 1.442695
  %v210 = vpow.pop %v209
  %v211 = vadd.f32 %v210, 1.0
  %v212 = vrcp.pop %v211
  %v213 = vmul.f32 %v211, %v212
  %v214 = vsub.f32 1.0, %v213
  %v215 = vmul.f32 %v212, %v214
  %v216 = vadd.f32 %v212, %v215
  %vm217 = vweird.f32 %v211
  %vm218 = vweird.f32 %v212
  %vm219 = vmor %vm217, %vm218
  %v220 = vsel %vm219, %v212, %v216
  %v221 = vand.u32 2147483647, %v211
  %vm222 = vcmp.eq.f32.partialorder %v221, 8.507059e+37
  %v223 = vand.u32 %v211, 2147483648
  %v224 = vor.u32 1.1754944e-38, %v223
  %v225 = vsel %vm222, %v224, %v220
  %v226 = vmul.f32 1.0, %v225
  %v227 = vadd.f32 %v205, %v160
  %229 = vrot.lane.b32.xlu0 %v227, 64
  %v230 = vpop.permute.xlu0 %229
  %v232 = vmul.f32 %v226, %v230
  %234 = vrot.lane.b32.xlu0 %v232, 64
  %v235 = vpop.permute.xlu0 %234
  %v237 = vadd.f32 %v93, %v235
  %v238 = vtanh.pop %v237
  %v239 = vsub.f32 1.0, %v226
  %241 = vrot.lane.b32.xlu0 %v238, 96
  %v242 = vpop.permute.xlu0 %241
  %v244 = vmul.f32 %v239, %v242
  %v245 = vmul.f32 %v226, %v181
  %v246 = vadd.f32 %v244, %v245
  %248 = vrot.lane.b32.xlu0 %v246, 96
  %v249 = vpop.permute.xlu0 %248
  %v250 = vsel %vm113, %v249, 0
  %252 = vmatpush.msra.mxu0 0.0
  %253 = vmatpush.msra.mxu0 0.0
  %254 = vmatpush.msra.mxu0 0.0
  %255 = vmatpush.msra.mxu0 0.0
  %256 = vmatpush.msra.mxu0 0.0
  %257 = vmatpush.msra.mxu0 0.0
  %258 = vmatpush.msra.mxu0 0.0
  %259 = vmatpush.msra.mxu0 0.0
  %260 = vmatpush.msra.mxu0 0.0
  %261 = vmatpush.msra.mxu0 0.0
  %262 = vmatpush.msra.mxu0 0.0
  %263 = vmatpush.msra.mxu0 0.0
  %264 = vmatpush.msra.mxu0 %v28
  %265 = vmatpush.msra.mxu0 %v27
  %266 = vmatpush.msra.mxu0 %v26
  %267 = vmatpush.msra.mxu0 %v25
  %268 = vmatmul.f32.gmra.mxu0 %v250
  %v269 = vpop.f32.mrf.mxu0
  %v270 = vadd.f32 0.0, %v269
  %271 = vdwg.mxu0
  %v272 = vadd.f32 %v96, %v270
  %v273 = vxor.u32 %v272, 2147483648
  %v274 = vmul.f32 %v273, 1.442695
  %v275 = vpow.pop %v274
  %v276 = vadd.f32 %v275, 1.0
  %v277 = vrcp.pop %v276
  %v278 = vmul.f32 %v276, %v277
  %v279 = vsub.f32 1.0, %v278
  %v280 = vmul.f32 %v277, %v279
  %v281 = vadd.f32 %v277, %v280
  %vm282 = vweird.f32 %v276
  %vm283 = vweird.f32 %v277
  %vm284 = vmor %vm282, %vm283
  %v285 = vsel %vm284, %v277, %v281
  %v286 = vand.u32 2147483647, %v276
  %vm287 = vcmp.eq.f32.partialorder %v286, 8.507059e+37
  %v288 = vand.u32 %v276, 2147483648
  %v289 = vor.u32 1.1754944e-38, %v288
  %v290 = vsel %vm287, %v289, %v285
  %v291 = vmul.f32 1.0, %v290
  %v292 = vadd.f32 %v270, %v160
  %294 = vrot.lane.b32.xlu0 %v292, 64
  %v295 = vpop.permute.xlu0 %294
  %v297 = vmul.f32 %v291, %v295
  %299 = vrot.lane.b32.xlu0 %v297, 64
  %v300 = vpop.permute.xlu0 %299
  %v302 = vadd.f32 %v96, %v300
  %v303 = vtanh.pop %v302
  %v304 = vsub.f32 1.0, %v291
  %306 = vrot.lane.b32.xlu0 %v303, 96
  %v307 = vpop.permute.xlu0 %306
  %v309 = vmul.f32 %v304, %v307
  %v310 = vmul.f32 %v291, %v246
  %v311 = vadd.f32 %v309, %v310
  %313 = vrot.lane.b32.xlu0 %v311, 96
  %v314 = vpop.permute.xlu0 %313
  %v315 = vsel %vm113, %v314, 0
  %317 = vmatpush.msra.mxu0 0.0
  %318 = vmatpush.msra.mxu0 0.0
  %319 = vmatpush.msra.mxu0 0.0
  %320 = vmatpush.msra.mxu0 0.0
  %321 = vmatpush.msra.mxu0 0.0
  %322 = vmatpush.msra.mxu0 0.0
  %323 = vmatpush.msra.mxu0 0.0
  %324 = vmatpush.msra.mxu0 0.0
  %325 = vmatpush.msra.mxu0 0.0
  %326 = vmatpush.msra.mxu0 0.0
  %327 = vmatpush.msra.mxu0 0.0
  %328 = vmatpush.msra.mxu0 0.0
  %329 = vmatpush.msra.mxu0 %v28
  %330 = vmatpush.msra.mxu0 %v27
  %331 = vmatpush.msra.mxu0 %v26
  %332 = vmatpush.msra.mxu0 %v25
  %333 = vmatmul.f32.gmra.mxu0 %v315
  %v334 = vpop.f32.mrf.mxu0
  %v335 = vadd.f32 0.0, %v334
  %336 = vdwg.mxu0
  %v337 = vadd.f32 %v99, %v335
  %v338 = vxor.u32 %v337, 2147483648
  %v339 = vmul.f32 %v338, 1.442695
  %v340 = vpow.pop %v339
  %v341 = vadd.f32 %v340, 1.0
  %v342 = vrcp.pop %v341
  %v343 = vmul.f32 %v341, %v342
  %v344 = vsub.f32 1.0, %v343
  %v345 = vmul.f32 %v342, %v344
  %v346 = vadd.f32 %v342, %v345
  %vm347 = vweird.f32 %v341
  %vm348 = vweird.f32 %v342
  %vm349 = vmor %vm347, %vm348
  %v350 = vsel %vm349, %v342, %v346
  %v351 = vand.u32 2147483647, %v341
  %vm352 = vcmp.eq.f32.partialorder %v351, 8.507059e+37
  %v353 = vand.u32 %v341, 2147483648
  %v354 = vor.u32 1.1754944e-38, %v353
  %v355 = vsel %vm352, %v354, %v350
  %v356 = vmul.f32 1.0, %v355
  %v357 = vadd.f32 %v335, %v160
  %359 = vrot.lane.b32.xlu0 %v357, 64
  %v360 = vpop.permute.xlu0 %359
  %v362 = vmul.f32 %v356, %v360
  %364 = vrot.lane.b32.xlu0 %v362, 64
  %v365 = vpop.permute.xlu0 %364
  %v367 = vadd.f32 %v99, %v365
  %v368 = vtanh.pop %v367
  %v369 = vsub.f32 1.0, %v356
  %371 = vrot.lane.b32.xlu0 %v368, 96
  %v372 = vpop.permute.xlu0 %371
  %v374 = vmul.f32 %v369, %v372
  %v375 = vmul.f32 %v356, %v311
  %v376 = vadd.f32 %v374, %v375
  %378 = vrot.lane.b32.xlu0 %v376, 96
  %v379 = vpop.permute.xlu0 %378
  %v380 = vsel %vm113, %v379, 0
  %382 = vmatpush.msra.mxu0 0.0
  %383 = vmatpush.msra.mxu0 0.0
  %384 = vmatpush.msra.mxu0 0.0
  %385 = vmatpush.msra.mxu0 0.0
  %386 = vmatpush.msra.mxu0 0.0
  %387 = vmatpush.msra.mxu0 0.0
  %388 = vmatpush.msra.mxu0 0.0
  %389 = vmatpush.msra.mxu0 0.0
  %390 = vmatpush.msra.mxu0 0.0
  %391 = vmatpush.msra.mxu0 0.0
  %392 = vmatpush.msra.mxu0 0.0
  %393 = vmatpush.msra.mxu0 0.0
  %394 = vmatpush.msra.mxu0 %v28
  %395 = vmatpush.msra.mxu0 %v27
  %396 = vmatpush.msra.mxu0 %v26
  %397 = vmatpush.msra.mxu0 %v25
  %398 = vmatmul.f32.gmra.mxu0 %v380
  %v399 = vpop.f32.mrf.mxu0
  %v400 = vadd.f32 0.0, %v399
  %401 = vdwg.mxu0
  %v402 = vadd.f32 %v102, %v400
  %v403 = vxor.u32 %v402, 2147483648
  %v404 = vmul.f32 %v403, 1.442695
  %v405 = vpow.pop %v404
  %v406 = vadd.f32 %v405, 1.0
  %v407 = vrcp.pop %v406
  %v408 = vmul.f32 %v406, %v407
  %v409 = vsub.f32 1.0, %v408
  %v410 = vmul.f32 %v407, %v409
  %v411 = vadd.f32 %v407, %v410
  %vm412 = vweird.f32 %v406
  %vm413 = vweird.f32 %v407
  %vm414 = vmor %vm412, %vm413
  %v415 = vsel %vm414, %v407, %v411
  %v416 = vand.u32 2147483647, %v406
  %vm417 = vcmp.eq.f32.partialorder %v416, 8.507059e+37
  %v418 = vand.u32 %v406, 2147483648
  %v419 = vor.u32 1.1754944e-38, %v418
  %v420 = vsel %vm417, %v419, %v415
  %v421 = vmul.f32 1.0, %v420
  %v422 = vadd.f32 %v400, %v160
  %424 = vrot.lane.b32.xlu0 %v422, 64
  %v425 = vpop.permute.xlu0 %424
  %v427 = vmul.f32 %v421, %v425
  %429 = vrot.lane.b32.xlu0 %v427, 64
  %v430 = vpop.permute.xlu0 %429
  %v432 = vadd.f32 %v102, %v430
  %v433 = vtanh.pop %v432
  %v434 = vsub.f32 1.0, %v421
  %436 = vrot.lane.b32.xlu0 %v433, 96
  %v437 = vpop.permute.xlu0 %436
  %v439 = vmul.f32 %v434, %v437
  %v440 = vmul.f32 %v421, %v376
  %v441 = vadd.f32 %v439, %v440
  %443 = vrot.lane.b32.xlu0 %v441, 96
  %v444 = vpop.permute.xlu0 %443
  %v445 = vsel %vm113, %v444, 0
  %447 = vmatpush.msra.mxu0 0.0
  %448 = vmatpush.msra.mxu0 0.0
  %449 = vmatpush.msra.mxu0 0.0
  %450 = vmatpush.msra.mxu0 0.0
  %451 = vmatpush.msra.mxu0 0.0
  %452 = vmatpush.msra.mxu0 0.0
  %453 = vmatpush.msra.mxu0 0.0
  %454 = vmatpush.msra.mxu0 0.0
  %455 = vmatpush.msra.mxu0 0.0
  %456 = vmatpush.msra.mxu0 0.0
  %457 = vmatpush.msra.mxu0 0.0
  %458 = vmatpush.msra.mxu0 0.0
  %459 = vmatpush.msra.mxu0 %v28
  %460 = vmatpush.msra.mxu0 %v27
  %461 = vmatpush.msra.mxu0 %v26
  %462 = vmatpush.msra.mxu0 %v25
  %463 = vmatmul.f32.gmra.mxu0 %v445
  %v464 = vpop.f32.mrf.mxu0
  %v465 = vadd.f32 0.0, %v464
  %466 = vdwg.mxu0
  %v467 = vadd.f32 %v105, %v465
  %v468 = vxor.u32 %v467, 2147483648
  %v469 = vmul.f32 %v468, 1.442695
  %v470 = vpow.pop %v469
  %v471 = vadd.f32 %v470, 1.0
  %v472 = vrcp.pop %v471
  %v473 = vmul.f32 %v471, %v472
  %v474 = vsub.f32 1.0, %v473
  %v475 = vmul.f32 %v472, %v474
  %v476 = vadd.f32 %v472, %v475
  %vm477 = vweird.f32 %v471
  %vm478 = vweird.f32 %v472
  %vm479 = vmor %vm477, %vm478
  %v480 = vsel %vm479, %v472, %v476
  %v481 = vand.u32 2147483647, %v471
  %vm482 = vcmp.eq.f32.partialorder %v481, 8.507059e+37
  %v483 = vand.u32 %v471, 2147483648
  %v484 = vor.u32 1.1754944e-38, %v483
  %v485 = vsel %vm482, %v484, %v480
  %v486 = vmul.f32 1.0, %v485
  %v487 = vadd.f32 %v465, %v160
  %489 = vrot.lane.b32.xlu0 %v487, 64
  %v490 = vpop.permute.xlu0 %489
  %v492 = vmul.f32 %v486, %v490
  %494 = vrot.lane.b32.xlu0 %v492, 64
  %v495 = vpop.permute.xlu0 %494
  %v497 = vadd.f32 %v105, %v495
  %v498 = vtanh.pop %v497
  %v499 = vsub.f32 1.0, %v486
  %501 = vrot.lane.b32.xlu0 %v498, 96
  %v502 = vpop.permute.xlu0 %501
  %v504 = vmul.f32 %v499, %v502
  %v505 = vmul.f32 %v486, %v441
  %v506 = vadd.f32 %v504, %v505
  %508 = vrot.lane.b32.xlu0 %v506, 96
  %v509 = vpop.permute.xlu0 %508
  %v510 = vsel %vm113, %v509, 0
  %512 = vmatpush.msra.mxu0 0.0
  %513 = vmatpush.msra.mxu0 0.0
  %514 = vmatpush.msra.mxu0 0.0
  %515 = vmatpush.msra.mxu0 0.0
  %516 = vmatpush.msra.mxu0 0.0
  %517 = vmatpush.msra.mxu0 0.0
  %518 = vmatpush.msra.mxu0 0.0
  %519 = vmatpush.msra.mxu0 0.0
  %520 = vmatpush.msra.mxu0 0.0
  %521 = vmatpush.msra.mxu0 0.0
  %522 = vmatpush.msra.mxu0 0.0
  %523 = vmatpush.msra.mxu0 0.0
  %524 = vmatpush.msra.mxu0 %v28
  %525 = vmatpush.msra.mxu0 %v27
  %526 = vmatpush.msra.mxu0 %v26
  %527 = vmatpush.msra.mxu0 %v25
  %528 = vmatmul.f32.gmra.mxu0 %v510
  %v529 = vpop.f32.mrf.mxu0
  %v530 = vadd.f32 0.0, %v529
  %531 = vdwg.mxu0
  %v532 = vadd.f32 %v108, %v530
  %v533 = vxor.u32 %v532, 2147483648
  %v534 = vmul.f32 %v533, 1.442695
  %v535 = vpow.pop %v534
  %v536 = vadd.f32 %v535, 1.0
  %v537 = vrcp.pop %v536
  %v538 = vmul.f32 %v536, %v537
  %v539 = vsub.f32 1.0, %v538
  %v540 = vmul.f32 %v537, %v539
  %v541 = vadd.f32 %v537, %v540
  %vm542 = vweird.f32 %v536
  %vm543 = vweird.f32 %v537
  %vm544 = vmor %vm542, %vm543
  %v545 = vsel %vm544, %v537, %v541
  %v546 = vand.u32 2147483647, %v536
  %vm547 = vcmp.eq.f32.partialorder %v546, 8.507059e+37
  %v548 = vand.u32 %v536, 2147483648
  %v549 = vor.u32 1.1754944e-38, %v548
  %v550 = vsel %vm547, %v549, %v545
  %v551 = vmul.f32 1.0, %v550
  %v552 = vadd.f32 %v530, %v160
  %554 = vrot.lane.b32.xlu0 %v552, 64
  %v555 = vpop.permute.xlu0 %554
  %v557 = vmul.f32 %v551, %v555
  %559 = vrot.lane.b32.xlu0 %v557, 64
  %v560 = vpop.permute.xlu0 %559
  %v562 = vadd.f32 %v108, %v560
  %v563 = vtanh.pop %v562
  %v564 = vsub.f32 1.0, %v551
  %566 = vrot.lane.b32.xlu0 %v563, 96
  %v567 = vpop.permute.xlu0 %566
  %v569 = vmul.f32 %v564, %v567
  %v570 = vmul.f32 %v551, %v506
  %v571 = vadd.f32 %v569, %v570
  %v572 = vld [vmem:[%s1] sm:$0xff]
  %574 = vrot.lane.b32.xlu0 %v572, 32
  %v575 = vpop.permute.xlu0 %574
  %v577 = vadd.f32 %v571, %v575
  %579 = vrot.lane.b32.xlu0 %v577, 96
  %v580 = vpop.permute.xlu0 %579
  %v581 = vsel %vm113, %v580, 0
  %583 = vmatpush.msra.mxu0 0.0
  %584 = vmatpush.msra.mxu0 0.0
  %585 = vmatpush.msra.mxu0 0.0
  %586 = vmatpush.msra.mxu0 0.0
  %587 = vmatpush.msra.mxu0 0.0
  %588 = vmatpush.msra.mxu0 0.0
  %589 = vmatpush.msra.mxu0 0.0
  %590 = vmatpush.msra.mxu0 0.0
  %591 = vmatpush.msra.mxu0 0.0
  %592 = vmatpush.msra.mxu0 0.0
  %593 = vmatpush.msra.mxu0 0.0
  %594 = vmatpush.msra.mxu0 0.0
  %595 = vmatpush.msra.mxu0 %v28
  %596 = vmatpush.msra.mxu0 %v27
  %597 = vmatpush.msra.mxu0 %v26
  %598 = vmatpush.msra.mxu0 %v25
  %599 = vmatmul.f32.gmra.mxu0 %v581
  %v600 = vpop.f32.mrf.mxu0
  %v601 = vadd.f32 0.0, %v600
  %602 = vdwg.mxu0
  %v603 = vadd.f32 %v111, %v601
  %v604 = vxor.u32 %v603, 2147483648
  %v605 = vmul.f32 %v604, 1.442695
  %v606 = vpow.pop %v605
  %v607 = vadd.f32 %v606, 1.0
  %v608 = vrcp.pop %v607
  %v609 = vmul.f32 %v607, %v608
  %v610 = vsub.f32 1.0, %v609
  %v611 = vmul.f32 %v608, %v610
  %v612 = vadd.f32 %v608, %v611
  %vm613 = vweird.f32 %v607
  %vm614 = vweird.f32 %v608
  %vm615 = vmor %vm613, %vm614
  %v616 = vsel %vm615, %v608, %v612
  %v617 = vand.u32 2147483647, %v607
  %vm618 = vcmp.eq.f32.partialorder %v617, 8.507059e+37
  %v619 = vand.u32 %v607, 2147483648
  %v620 = vor.u32 1.1754944e-38, %v619
  %v621 = vsel %vm618, %v620, %v616
  %v622 = vmul.f32 1.0, %v621
  %v623 = vadd.f32 %v601, %v160
  %625 = vrot.lane.b32.xlu0 %v623, 64
  %v626 = vpop.permute.xlu0 %625
  %v628 = vmul.f32 %v622, %v626
  %630 = vrot.lane.b32.xlu0 %v628, 64
  %v631 = vpop.permute.xlu0 %630
  %v633 = vadd.f32 %v111, %v631
  %v634 = vtanh.pop %v633
  %v635 = vsub.f32 1.0, %v622
  %637 = vrot.lane.b32.xlu0 %v634, 96
  %v638 = vpop.permute.xlu0 %637
  %v640 = vmul.f32 %v635, %v638
  %v641 = vmul.f32 %v622, %v577
  %v642 = vadd.f32 %v640, %v641
  %v644 = vperm.slane %v37, 2
  %v645 = vperm.slane %v37, 6
  %v648 = vperm.slane %v644, 2
  %v649 = vperm.slane %v645, 2
  %651 = vrot.lane.b32.xlu0 %v642, 96
  %v652 = vpop.permute.xlu0 %651
  %v653 = vsel %vm113, %v652, 0
  %655 = vmatpush.msra.mxu0 0.0
  %656 = vmatpush.msra.mxu0 0.0
  %657 = vmatpush.msra.mxu0 0.0
  %658 = vmatpush.msra.mxu0 0.0
  %659 = vmatpush.msra.mxu0 0.0
  %660 = vmatpush.msra.mxu0 0.0
  %661 = vmatpush.msra.mxu0 0.0
  %662 = vmatpush.msra.mxu0 0.0
  %663 = vmatpush.msra.mxu0 0.0
  %664 = vmatpush.msra.mxu0 0.0
  %665 = vmatpush.msra.mxu0 0.0
  %666 = vmatpush.msra.mxu0 0.0
  %667 = vmatpush.msra.mxu0 %v35
  %668 = vmatpush.msra.mxu0 %v33
  %669 = vmatpush.msra.mxu0 %v31
  %670 = vmatpush.msra.mxu0 %v29
  %671 = vmatmul.f32.gmra.mxu0 %v653
  %v672 = vpop.f32.mrf.mxu0
  %v673 = vadd.f32 %v648, %v672
  %674 = vdwg.mxu0
  %675 = vmatpush.msra.mxu0 0.0
  %676 = vmatpush.msra.mxu0 0.0
  %677 = vmatpush.msra.mxu0 0.0
  %678 = vmatpush.msra.mxu0 0.0
  %679 = vmatpush.msra.mxu0 0.0
  %680 = vmatpush.msra.mxu0 0.0
  %681 = vmatpush.msra.mxu0 0.0
  %682 = vmatpush.msra.mxu0 0.0
  %683 = vmatpush.msra.mxu0 0.0
  %684 = vmatpush.msra.mxu0 0.0
  %685 = vmatpush.msra.mxu0 0.0
  %686 = vmatpush.msra.mxu0 0.0
  %687 = vmatpush.msra.mxu0 %v36
  %688 = vmatpush.msra.mxu0 %v34
  %689 = vmatpush.msra.mxu0 %v32
  %690 = vmatpush.msra.mxu0 %v30
  %691 = vmatmul.f32.gmra.mxu0 %v653
  %v692 = vpop.f32.mrf.mxu0
  %v693 = vadd.f32 %v649, %v692
  %694 = vdwg.mxu0
  %v695 = vadd.f32 %v111, %v673
  %698 = vrot.lane.b32.xlu0 %v673, 32
  %v699 = vpop.permute.xlu0 %698
  %700 = vrot.lane.b32.xlu0 %v693, 32
  %v701 = vpop.permute.xlu0 %700
  %v702 = vsel %vm113, %v699, %v701
  %v704 = vadd.f32 %v45, %v702
  %705 = vmatpush.msra.mxu0 0.0
  %706 = vmatpush.msra.mxu0 0.0
  %707 = vmatpush.msra.mxu0 0.0
  %708 = vmatpush.msra.mxu0 0.0
  %709 = vmatpush.msra.mxu0 0.0
  %710 = vmatpush.msra.mxu0 0.0
  %711 = vmatpush.msra.mxu0 0.0
  %712 = vmatpush.msra.mxu0 0.0
  %713 = vmatpush.msra.mxu0 0.0
  %714 = vmatpush.msra.mxu0 0.0
  %715 = vmatpush.msra.mxu0 0.0
  %716 = vmatpush.msra.mxu0 0.0
  %717 = vmatpush.msra.mxu0 %v28
  %718 = vmatpush.msra.mxu0 %v27
  %719 = vmatpush.msra.mxu0 %v26
  %720 = vmatpush.msra.mxu0 %v25
  %721 = vmatmul.f32.gmra.mxu0 %v653
  %v722 = vpop.f32.mrf.mxu0
  %v723 = vadd.f32 0.0, %v722
  %724 = vdwg.mxu0
  %v725 = vadd.f32 %v695, %v723
  %v726 = vxor.u32 %v725, 2147483648
  %v727 = vmul.f32 %v726, 1.442695
  %v728 = vpow.pop %v727
  %v729 = vadd.f32 %v728, 1.0
  %v730 = vrcp.pop %v729
  %v731 = vmul.f32 %v729, %v730
  %v732 = vsub.f32 1.0, %v731
  %v733 = vmul.f32 %v730, %v732
  %v734 = vadd.f32 %v730, %v733
  %vm735 = vweird.f32 %v729
  %vm736 = vweird.f32 %v730
  %vm737 = vmor %vm735, %vm736
  %v738 = vsel %vm737, %v730, %v734
  %v739 = vand.u32 2147483647, %v729
  %vm740 = vcmp.eq.f32.partialorder %v739, 8.507059e+37
  %v741 = vand.u32 %v729, 2147483648
  %v742 = vor.u32 1.1754944e-38, %v741
  %v743 = vsel %vm740, %v742, %v738
  %v744 = vmul.f32 1.0, %v743
  %v745 = vadd.f32 %v723, %v160
  %747 = vrot.lane.b32.xlu0 %v745, 64
  %v748 = vpop.permute.xlu0 %747
  %v750 = vmul.f32 %v744, %v748
  %752 = vrot.lane.b32.xlu0 %v750, 64
  %v753 = vpop.permute.xlu0 %752
  %v755 = vadd.f32 %v695, %v753
  %v756 = vtanh.pop %v755
  %v757 = vsub.f32 1.0, %v744
  %759 = vrot.lane.b32.xlu0 %v756, 96
  %v760 = vpop.permute.xlu0 %759
  %v762 = vmul.f32 %v757, %v760
  %v763 = vmul.f32 %v744, %v642
  %v764 = vadd.f32 %v762, %v763
  %766 = vrot.lane.b32.xlu0 %v764, 96
  %v767 = vpop.permute.xlu0 %766
  %v768 = vsel %vm113, %v767, 0
  %770 = vmatpush.msra.mxu0 0.0
  %771 = vmatpush.msra.mxu0 0.0
  %772 = vmatpush.msra.mxu0 0.0
  %773 = vmatpush.msra.mxu0 0.0
  %774 = vmatpush.msra.mxu0 0.0
  %775 = vmatpush.msra.mxu0 0.0
  %776 = vmatpush.msra.mxu0 0.0
  %777 = vmatpush.msra.mxu0 0.0
  %778 = vmatpush.msra.mxu0 0.0
  %779 = vmatpush.msra.mxu0 0.0
  %780 = vmatpush.msra.mxu0 0.0
  %781 = vmatpush.msra.mxu0 0.0
  %782 = vmatpush.msra.mxu0 %v35
  %783 = vmatpush.msra.mxu0 %v33
  %784 = vmatpush.msra.mxu0 %v31
  %785 = vmatpush.msra.mxu0 %v29
  %786 = vmatmul.f32.gmra.mxu0 %v768
  %v787 = vpop.f32.mrf.mxu0
  %v788 = vadd.f32 %v648, %v787
  %789 = vdwg.mxu0
  %790 = vmatpush.msra.mxu0 0.0
  %791 = vmatpush.msra.mxu0 0.0
  %792 = vmatpush.msra.mxu0 0.0
  %793 = vmatpush.msra.mxu0 0.0
  %794 = vmatpush.msra.mxu0 0.0
  %795 = vmatpush.msra.mxu0 0.0
  %796 = vmatpush.msra.mxu0 0.0
  %797 = vmatpush.msra.mxu0 0.0
  %798 = vmatpush.msra.mxu0 0.0
  %799 = vmatpush.msra.mxu0 0.0
  %800 = vmatpush.msra.mxu0 0.0
  %801 = vmatpush.msra.mxu0 0.0
  %802 = vmatpush.msra.mxu0 %v36
  %803 = vmatpush.msra.mxu0 %v34
  %804 = vmatpush.msra.mxu0 %v32
  %805 = vmatpush.msra.mxu0 %v30
  %806 = vmatmul.f32.gmra.mxu0 %v768
  %v807 = vpop.f32.mrf.mxu0
  %v808 = vadd.f32 %v649, %v807
  %809 = vdwg.mxu0
  %v810 = vadd.f32 %v695, %v788
  %813 = vrot.lane.b32.xlu0 %v788, 32
  %v814 = vpop.permute.xlu0 %813
  %815 = vrot.lane.b32.xlu0 %v808, 32
  %v816 = vpop.permute.xlu0 %815
  %v817 = vsel %vm113, %v814, %v816
  %v819 = vadd.f32 %v704, %v817
  %820 = vmatpush.msra.mxu0 0.0
  %821 = vmatpush.msra.mxu0 0.0
  %822 = vmatpush.msra.mxu0 0.0
  %823 = vmatpush.msra.mxu0 0.0
  %824 = vmatpush.msra.mxu0 0.0
  %825 = vmatpush.msra.mxu0 0.0
  %826 = vmatpush.msra.mxu0 0.0
  %827 = vmatpush.msra.mxu0 0.0
  %828 = vmatpush.msra.mxu0 0.0
  %829 = vmatpush.msra.mxu0 0.0
  %830 = vmatpush.msra.mxu0 0.0
  %831 = vmatpush.msra.mxu0 0.0
  %832 = vmatpush.msra.mxu0 %v28
  %833 = vmatpush.msra.mxu0 %v27
  %834 = vmatpush.msra.mxu0 %v26
  %835 = vmatpush.msra.mxu0 %v25
  %836 = vmatmul.f32.gmra.mxu0 %v768
  %v837 = vpop.f32.mrf.mxu0
  %v838 = vadd.f32 0.0, %v837
  %839 = vdwg.mxu0
  %v840 = vadd.f32 %v810, %v838
  %v841 = vxor.u32 %v840, 2147483648
  %v842 = vmul.f32 %v841, 1.442695
  %v843 = vpow.pop %v842
  %v844 = vadd.f32 %v843, 1.0
  %v845 = vrcp.pop %v844
  %v846 = vmul.f32 %v844, %v845
  %v847 = vsub.f32 1.0, %v846
  %v848 = vmul.f32 %v845, %v847
  %v849 = vadd.f32 %v845, %v848
  %vm850 = vweird.f32 %v844
  %vm851 = vweird.f32 %v845
  %vm852 = vmor %vm850, %vm851
  %v853 = vsel %vm852, %v845, %v849
  %v854 = vand.u32 2147483647, %v844
  %vm855 = vcmp.eq.f32.partialorder %v854, 8.507059e+37
  %v856 = vand.u32 %v844, 2147483648
  %v857 = vor.u32 1.1754944e-38, %v856
  %v858 = vsel %vm855, %v857, %v853
  %v859 = vmul.f32 1.0, %v858
  %v860 = vadd.f32 %v838, %v160
  %862 = vrot.lane.b32.xlu0 %v860, 64
  %v863 = vpop.permute.xlu0 %862
  %v865 = vmul.f32 %v859, %v863
  %867 = vrot.lane.b32.xlu0 %v865, 64
  %v868 = vpop.permute.xlu0 %867
  %v870 = vadd.f32 %v810, %v868
  %v871 = vtanh.pop %v870
  %v872 = vsub.f32 1.0, %v859
  %874 = vrot.lane.b32.xlu0 %v871, 96
  %v875 = vpop.permute.xlu0 %874
  %v877 = vmul.f32 %v872, %v875
  %v878 = vmul.f32 %v859, %v764
  %v879 = vadd.f32 %v877, %v878
  %881 = vrot.lane.b32.xlu0 %v879, 96
  %v882 = vpop.permute.xlu0 %881
  %v883 = vsel %vm113, %v882, 0
  %885 = vmatpush.msra.mxu0 0.0
  %886 = vmatpush.msra.mxu0 0.0
  %887 = vmatpush.msra.mxu0 0.0
  %888 = vmatpush.msra.mxu0 0.0
  %889 = vmatpush.msra.mxu0 0.0
  %890 = vmatpush.msra.mxu0 0.0
  %891 = vmatpush.msra.mxu0 0.0
  %892 = vmatpush.msra.mxu0 0.0
  %893 = vmatpush.msra.mxu0 0.0
  %894 = vmatpush.msra.mxu0 0.0
  %895 = vmatpush.msra.mxu0 0.0
  %896 = vmatpush.msra.mxu0 0.0
  %897 = vmatpush.msra.mxu0 %v35
  %898 = vmatpush.msra.mxu0 %v33
  %899 = vmatpush.msra.mxu0 %v31
  %900 = vmatpush.msra.mxu0 %v29
  %901 = vmatmul.f32.gmra.mxu0 %v883
  %v902 = vpop.f32.mrf.mxu0
  %v903 = vadd.f32 %v648, %v902
  %904 = vdwg.mxu0
  %905 = vmatpush.msra.mxu0 0.0
  %906 = vmatpush.msra.mxu0 0.0
  %907 = vmatpush.msra.mxu0 0.0
  %908 = vmatpush.msra.mxu0 0.0
  %909 = vmatpush.msra.mxu0 0.0
  %910 = vmatpush.msra.mxu0 0.0
  %911 = vmatpush.msra.mxu0 0.0
  %912 = vmatpush.msra.mxu0 0.0
  %913 = vmatpush.msra.mxu0 0.0
  %914 = vmatpush.msra.mxu0 0.0
  %915 = vmatpush.msra.mxu0 0.0
  %916 = vmatpush.msra.mxu0 0.0
  %917 = vmatpush.msra.mxu0 %v36
  %918 = vmatpush.msra.mxu0 %v34
  %919 = vmatpush.msra.mxu0 %v32
  %920 = vmatpush.msra.mxu0 %v30
  %921 = vmatmul.f32.gmra.mxu0 %v883
  %v922 = vpop.f32.mrf.mxu0
  %v923 = vadd.f32 %v649, %v922
  %924 = vdwg.mxu0
  %v925 = vadd.f32 %v810, %v903
  %928 = vrot.lane.b32.xlu0 %v903, 32
  %v929 = vpop.permute.xlu0 %928
  %930 = vrot.lane.b32.xlu0 %v923, 32
  %v931 = vpop.permute.xlu0 %930
  %v932 = vsel %vm113, %v929, %v931
  %v934 = vadd.f32 %v819, %v932
  %935 = vmatpush.msra.mxu0 0.0
  %936 = vmatpush.msra.mxu0 0.0
  %937 = vmatpush.msra.mxu0 0.0
  %938 = vmatpush.msra.mxu0 0.0
  %939 = vmatpush.msra.mxu0 0.0
  %940 = vmatpush.msra.mxu0 0.0
  %941 = vmatpush.msra.mxu0 0.0
  %942 = vmatpush.msra.mxu0 0.0
  %943 = vmatpush.msra.mxu0 0.0
  %944 = vmatpush.msra.mxu0 0.0
  %945 = vmatpush.msra.mxu0 0.0
  %946 = vmatpush.msra.mxu0 0.0
  %947 = vmatpush.msra.mxu0 %v28
  %948 = vmatpush.msra.mxu0 %v27
  %949 = vmatpush.msra.mxu0 %v26
  %950 = vmatpush.msra.mxu0 %v25
  %951 = vmatmul.f32.gmra.mxu0 %v883
  %v952 = vpop.f32.mrf.mxu0
  %v953 = vadd.f32 0.0, %v952
  %954 = vdwg.mxu0
  %v955 = vadd.f32 %v925, %v953
  %v956 = vxor.u32 %v955, 2147483648
  %v957 = vmul.f32 %v956, 1.442695
  %v958 = vpow.pop %v957
  %v959 = vadd.f32 %v958, 1.0
  %v960 = vrcp.pop %v959
  %v961 = vmul.f32 %v959, %v960
  %v962 = vsub.f32 1.0, %v961
  %v963 = vmul.f32 %v960, %v962
  %v964 = vadd.f32 %v960, %v963
  %vm965 = vweird.f32 %v959
  %vm966 = vweird.f32 %v960
  %vm967 = vmor %vm965, %vm966
  %v968 = vsel %vm967, %v960, %v964
  %v969 = vand.u32 2147483647, %v959
  %vm970 = vcmp.eq.f32.partialorder %v969, 8.507059e+37
  %v971 = vand.u32 %v959, 2147483648
  %v972 = vor.u32 1.1754944e-38, %v971
  %v973 = vsel %vm970, %v972, %v968
  %v974 = vmul.f32 1.0, %v973
  %v975 = vadd.f32 %v953, %v160
  %977 = vrot.lane.b32.xlu0 %v975, 64
  %v978 = vpop.permute.xlu0 %977
  %v980 = vmul.f32 %v974, %v978
  %982 = vrot.lane.b32.xlu0 %v980, 64
  %v983 = vpop.permute.xlu0 %982
  %v985 = vadd.f32 %v925, %v983
  %v986 = vtanh.pop %v985
  %v987 = vsub.f32 1.0, %v974
  %989 = vrot.lane.b32.xlu0 %v986, 96
  %v990 = vpop.permute.xlu0 %989
  %v992 = vmul.f32 %v987, %v990
  %v993 = vmul.f32 %v974, %v879
  %v994 = vadd.f32 %v992, %v993
  %996 = vrot.lane.b32.xlu0 %v994, 96
  %v997 = vpop.permute.xlu0 %996
  %v998 = vsel %vm113, %v997, 0
  %1000 = vmatpush.msra.mxu0 0.0
  %1001 = vmatpush.msra.mxu0 0.0
  %1002 = vmatpush.msra.mxu0 0.0
  %1003 = vmatpush.msra.mxu0 0.0
  %1004 = vmatpush.msra.mxu0 0.0
  %1005 = vmatpush.msra.mxu0 0.0
  %1006 = vmatpush.msra.mxu0 0.0
  %1007 = vmatpush.msra.mxu0 0.0
  %1008 = vmatpush.msra.mxu0 0.0
  %1009 = vmatpush.msra.mxu0 0.0
  %1010 = vmatpush.msra.mxu0 0.0
  %1011 = vmatpush.msra.mxu0 0.0
  %1012 = vmatpush.msra.mxu0 %v35
  %1013 = vmatpush.msra.mxu0 %v33
  %1014 = vmatpush.msra.mxu0 %v31
  %1015 = vmatpush.msra.mxu0 %v29
  %1016 = vmatmul.f32.gmra.mxu0 %v998
  %v1017 = vpop.f32.mrf.mxu0
  %v1018 = vadd.f32 %v648, %v1017
  %1019 = vdwg.mxu0
  %1020 = vmatpush.msra.mxu0 0.0
  %1021 = vmatpush.msra.mxu0 0.0
  %1022 = vmatpush.msra.mxu0 0.0
  %1023 = vmatpush.msra.mxu0 0.0
  %1024 = vmatpush.msra.mxu0 0.0
  %1025 = vmatpush.msra.mxu0 0.0
  %1026 = vmatpush.msra.mxu0 0.0
  %1027 = vmatpush.msra.mxu0 0.0
  %1028 = vmatpush.msra.mxu0 0.0
  %1029 = vmatpush.msra.mxu0 0.0
  %1030 = vmatpush.msra.mxu0 0.0
  %1031 = vmatpush.msra.mxu0 0.0
  %1032 = vmatpush.msra.mxu0 %v36
  %1033 = vmatpush.msra.mxu0 %v34
  %1034 = vmatpush.msra.mxu0 %v32
  %1035 = vmatpush.msra.mxu0 %v30
  %1036 = vmatmul.f32.gmra.mxu0 %v998
  %v1037 = vpop.f32.mrf.mxu0
  %v1038 = vadd.f32 %v649, %v1037
  %1039 = vdwg.mxu0
  %v1040 = vadd.f32 %v925, %v1018
  %1043 = vrot.lane.b32.xlu0 %v1018, 32
  %v1044 = vpop.permute.xlu0 %1043
  %1045 = vrot.lane.b32.xlu0 %v1038, 32
  %v1046 = vpop.permute.xlu0 %1045
  %v1047 = vsel %vm113, %v1044, %v1046
  %v1049 = vadd.f32 %v934, %v1047
  %1050 = vmatpush.msra.mxu0 0.0
  %1051 = vmatpush.msra.mxu0 0.0
  %1052 = vmatpush.msra.mxu0 0.0
  %1053 = vmatpush.msra.mxu0 0.0
  %1054 = vmatpush.msra.mxu0 0.0
  %1055 = vmatpush.msra.mxu0 0.0
  %1056 = vmatpush.msra.mxu0 0.0
  %1057 = vmatpush.msra.mxu0 0.0
  %1058 = vmatpush.msra.mxu0 0.0
  %1059 = vmatpush.msra.mxu0 0.0
  %1060 = vmatpush.msra.mxu0 0.0
  %1061 = vmatpush.msra.mxu0 0.0
  %1062 = vmatpush.msra.mxu0 %v28
  %1063 = vmatpush.msra.mxu0 %v27
  %1064 = vmatpush.msra.mxu0 %v26
  %1065 = vmatpush.msra.mxu0 %v25
  %1066 = vmatmul.f32.gmra.mxu0 %v998
  %v1067 = vpop.f32.mrf.mxu0
  %v1068 = vadd.f32 0.0, %v1067
  %1069 = vdwg.mxu0
  %v1070 = vadd.f32 %v1040, %v1068
  %v1071 = vxor.u32 %v1070, 2147483648
  %v1072 = vmul.f32 %v1071, 1.442695
  %v1073 = vpow.pop %v1072
  %v1074 = vadd.f32 %v1073, 1.0
  %v1075 = vrcp.pop %v1074
  %v1076 = vmul.f32 %v1074, %v1075
  %v1077 = vsub.f32 1.0, %v1076
  %v1078 = vmul.f32 %v1075, %v1077
  %v1079 = vadd.f32 %v1075, %v1078
  %vm1080 = vweird.f32 %v1074
  %vm1081 = vweird.f32 %v1075
  %vm1082 = vmor %vm1080, %vm1081
  %v1083 = vsel %vm1082, %v1075, %v1079
  %v1084 = vand.u32 2147483647, %v1074
  %vm1085 = vcmp.eq.f32.partialorder %v1084, 8.507059e+37
  %v1086 = vand.u32 %v1074, 2147483648
  %v1087 = vor.u32 1.1754944e-38, %v1086
  %v1088 = vsel %vm1085, %v1087, %v1083
  %v1089 = vmul.f32 1.0, %v1088
  %v1090 = vadd.f32 %v1068, %v160
  %1092 = vrot.lane.b32.xlu0 %v1090, 64
  %v1093 = vpop.permute.xlu0 %1092
  %v1095 = vmul.f32 %v1089, %v1093
  %1097 = vrot.lane.b32.xlu0 %v1095, 64
  %v1098 = vpop.permute.xlu0 %1097
  %v1100 = vadd.f32 %v1040, %v1098
  %v1101 = vtanh.pop %v1100
  %v1102 = vsub.f32 1.0, %v1089
  %1104 = vrot.lane.b32.xlu0 %v1101, 96
  %v1105 = vpop.permute.xlu0 %1104
  %v1107 = vmul.f32 %v1102, %v1105
  %v1108 = vmul.f32 %v1089, %v994
  %v1109 = vadd.f32 %v1107, %v1108
  %1111 = vrot.lane.b32.xlu0 %v1109, 96
  %v1112 = vpop.permute.xlu0 %1111
  %v1113 = vsel %vm113, %v1112, 0
  %1115 = vmatpush.msra.mxu0 0.0
  %1116 = vmatpush.msra.mxu0 0.0
  %1117 = vmatpush.msra.mxu0 0.0
  %1118 = vmatpush.msra.mxu0 0.0
  %1119 = vmatpush.msra.mxu0 0.0
  %1120 = vmatpush.msra.mxu0 0.0
  %1121 = vmatpush.msra.mxu0 0.0
  %1122 = vmatpush.msra.mxu0 0.0
  %1123 = vmatpush.msra.mxu0 0.0
  %1124 = vmatpush.msra.mxu0 0.0
  %1125 = vmatpush.msra.mxu0 0.0
  %1126 = vmatpush.msra.mxu0 0.0
  %1127 = vmatpush.msra.mxu0 %v35
  %1128 = vmatpush.msra.mxu0 %v33
  %1129 = vmatpush.msra.mxu0 %v31
  %1130 = vmatpush.msra.mxu0 %v29
  %1131 = vmatmul.f32.gmra.mxu0 %v1113
  %v1132 = vpop.f32.mrf.mxu0
  %v1133 = vadd.f32 %v648, %v1132
  %1134 = vdwg.mxu0
  %1135 = vmatpush.msra.mxu0 0.0
  %1136 = vmatpush.msra.mxu0 0.0
  %1137 = vmatpush.msra.mxu0 0.0
  %1138 = vmatpush.msra.mxu0 0.0
  %1139 = vmatpush.msra.mxu0 0.0
  %1140 = vmatpush.msra.mxu0 0.0
  %1141 = vmatpush.msra.mxu0 0.0
  %1142 = vmatpush.msra.mxu0 0.0
  %1143 = vmatpush.msra.mxu0 0.0
  %1144 = vmatpush.msra.mxu0 0.0
  %1145 = vmatpush.msra.mxu0 0.0
  %1146 = vmatpush.msra.mxu0 0.0
  %1147 = vmatpush.msra.mxu0 %v36
  %1148 = vmatpush.msra.mxu0 %v34
  %1149 = vmatpush.msra.mxu0 %v32
  %1150 = vmatpush.msra.mxu0 %v30
  %1151 = vmatmul.f32.gmra.mxu0 %v1113
  %v1152 = vpop.f32.mrf.mxu0
  %v1153 = vadd.f32 %v649, %v1152
  %1154 = vdwg.mxu0
  %v1155 = vadd.f32 %v1040, %v1133
  %1158 = vrot.lane.b32.xlu0 %v1133, 32
  %v1159 = vpop.permute.xlu0 %1158
  %1160 = vrot.lane.b32.xlu0 %v1153, 32
  %v1161 = vpop.permute.xlu0 %1160
  %v1162 = vsel %vm113, %v1159, %v1161
  %v1164 = vadd.f32 %v1049, %v1162
  %1165 = vmatpush.msra.mxu0 0.0
  %1166 = vmatpush.msra.mxu0 0.0
  %1167 = vmatpush.msra.mxu0 0.0
  %1168 = vmatpush.msra.mxu0 0.0
  %1169 = vmatpush.msra.mxu0 0.0
  %1170 = vmatpush.msra.mxu0 0.0
  %1171 = vmatpush.msra.mxu0 0.0
  %1172 = vmatpush.msra.mxu0 0.0
  %1173 = vmatpush.msra.mxu0 0.0
  %1174 = vmatpush.msra.mxu0 0.0
  %1175 = vmatpush.msra.mxu0 0.0
  %1176 = vmatpush.msra.mxu0 0.0
  %1177 = vmatpush.msra.mxu0 %v28
  %1178 = vmatpush.msra.mxu0 %v27
  %1179 = vmatpush.msra.mxu0 %v26
  %1180 = vmatpush.msra.mxu0 %v25
  %1181 = vmatmul.f32.gmra.mxu0 %v1113
  %v1182 = vpop.f32.mrf.mxu0
  %v1183 = vadd.f32 0.0, %v1182
  %1184 = vdwg.mxu0
  %v1185 = vadd.f32 %v1155, %v1183
  %v1186 = vxor.u32 %v1185, 2147483648
  %v1187 = vmul.f32 %v1186, 1.442695
  %v1188 = vpow.pop %v1187
  %v1189 = vadd.f32 %v1188, 1.0
  %v1190 = vrcp.pop %v1189
  %v1191 = vmul.f32 %v1189, %v1190
  %v1192 = vsub.f32 1.0, %v1191
  %v1193 = vmul.f32 %v1190, %v1192
  %v1194 = vadd.f32 %v1190, %v1193
  %vm1195 = vweird.f32 %v1189
  %vm1196 = vweird.f32 %v1190
  %vm1197 = vmor %vm1195, %vm1196
  %v1198 = vsel %vm1197, %v1190, %v1194
  %v1199 = vand.u32 2147483647, %v1189
  %vm1200 = vcmp.eq.f32.partialorder %v1199, 8.507059e+37
  %v1201 = vand.u32 %v1189, 2147483648
  %v1202 = vor.u32 1.1754944e-38, %v1201
  %v1203 = vsel %vm1200, %v1202, %v1198
  %v1204 = vmul.f32 1.0, %v1203
  %v1205 = vadd.f32 %v1183, %v160
  %1207 = vrot.lane.b32.xlu0 %v1205, 64
  %v1208 = vpop.permute.xlu0 %1207
  %v1210 = vmul.f32 %v1204, %v1208
  %1212 = vrot.lane.b32.xlu0 %v1210, 64
  %v1213 = vpop.permute.xlu0 %1212
  %v1215 = vadd.f32 %v1155, %v1213
  %v1216 = vtanh.pop %v1215
  %v1217 = vsub.f32 1.0, %v1204
  %1219 = vrot.lane.b32.xlu0 %v1216, 96
  %v1220 = vpop.permute.xlu0 %1219
  %v1222 = vmul.f32 %v1217, %v1220
  %v1223 = vmul.f32 %v1204, %v1109
  %v1224 = vadd.f32 %v1222, %v1223
  %1226 = vrot.lane.b32.xlu0 %v1224, 96
  %v1227 = vpop.permute.xlu0 %1226
  %v1228 = vsel %vm113, %v1227, 0
  %1230 = vmatpush.msra.mxu0 0.0
  %1231 = vmatpush.msra.mxu0 0.0
  %1232 = vmatpush.msra.mxu0 0.0
  %1233 = vmatpush.msra.mxu0 0.0
  %1234 = vmatpush.msra.mxu0 0.0
  %1235 = vmatpush.msra.mxu0 0.0
  %1236 = vmatpush.msra.mxu0 0.0
  %1237 = vmatpush.msra.mxu0 0.0
  %1238 = vmatpush.msra.mxu0 0.0
  %1239 = vmatpush.msra.mxu0 0.0
  %1240 = vmatpush.msra.mxu0 0.0
  %1241 = vmatpush.msra.mxu0 0.0
  %1242 = vmatpush.msra.mxu0 %v35
  %1243 = vmatpush.msra.mxu0 %v33
  %1244 = vmatpush.msra.mxu0 %v31
  %1245 = vmatpush.msra.mxu0 %v29
  %1246 = vmatmul.f32.gmra.mxu0 %v1228
  %v1247 = vpop.f32.mrf.mxu0
  %v1248 = vadd.f32 %v648, %v1247
  %1249 = vdwg.mxu0
  %1250 = vmatpush.msra.mxu0 0.0
  %1251 = vmatpush.msra.mxu0 0.0
  %1252 = vmatpush.msra.mxu0 0.0
  %1253 = vmatpush.msra.mxu0 0.0
  %1254 = vmatpush.msra.mxu0 0.0
  %1255 = vmatpush.msra.mxu0 0.0
  %1256 = vmatpush.msra.mxu0 0.0
  %1257 = vmatpush.msra.mxu0 0.0
  %1258 = vmatpush.msra.mxu0 0.0
  %1259 = vmatpush.msra.mxu0 0.0
  %1260 = vmatpush.msra.mxu0 0.0
  %1261 = vmatpush.msra.mxu0 0.0
  %1262 = vmatpush.msra.mxu0 %v36
  %1263 = vmatpush.msra.mxu0 %v34
  %1264 = vmatpush.msra.mxu0 %v32
  %1265 = vmatpush.msra.mxu0 %v30
  %1266 = vmatmul.f32.gmra.mxu0 %v1228
  %v1267 = vpop.f32.mrf.mxu0
  %v1268 = vadd.f32 %v649, %v1267
  %1269 = vdwg.mxu0
  %v1270 = vadd.f32 %v1155, %v1248
  %1273 = vrot.lane.b32.xlu0 %v1248, 32
  %v1274 = vpop.permute.xlu0 %1273
  %1275 = vrot.lane.b32.xlu0 %v1268, 32
  %v1276 = vpop.permute.xlu0 %1275
  %v1277 = vsel %vm113, %v1274, %v1276
  %v1279 = vadd.f32 %v1164, %v1277
  %1280 = vmatpush.msra.mxu0 0.0
  %1281 = vmatpush.msra.mxu0 0.0
  %1282 = vmatpush.msra.mxu0 0.0
  %1283 = vmatpush.msra.mxu0 0.0
  %1284 = vmatpush.msra.mxu0 0.0
  %1285 = vmatpush.msra.mxu0 0.0
  %1286 = vmatpush.msra.mxu0 0.0
  %1287 = vmatpush.msra.mxu0 0.0
  %1288 = vmatpush.msra.mxu0 0.0
  %1289 = vmatpush.msra.mxu0 0.0
  %1290 = vmatpush.msra.mxu0 0.0
  %1291 = vmatpush.msra.mxu0 0.0
  %1292 = vmatpush.msra.mxu0 %v28
  %1293 = vmatpush.msra.mxu0 %v27
  %1294 = vmatpush.msra.mxu0 %v26
  %1295 = vmatpush.msra.mxu0 %v25
  %1296 = vmatmul.f32.gmra.mxu0 %v1228
  %v1297 = vpop.f32.mrf.mxu0
  %v1298 = vadd.f32 0.0, %v1297
  %1299 = vdwg.mxu0
  %v1300 = vadd.f32 %v1270, %v1298
  %v1301 = vxor.u32 %v1300, 2147483648
  %v1302 = vmul.f32 %v1301, 1.442695
  %v1303 = vpow.pop %v1302
  %v1304 = vadd.f32 %v1303, 1.0
  %v1305 = vrcp.pop %v1304
  %v1306 = vmul.f32 %v1304, %v1305
  %v1307 = vsub.f32 1.0, %v1306
  %v1308 = vmul.f32 %v1305, %v1307
  %v1309 = vadd.f32 %v1305, %v1308
  %vm1310 = vweird.f32 %v1304
  %vm1311 = vweird.f32 %v1305
  %vm1312 = vmor %vm1310, %vm1311
  %v1313 = vsel %vm1312, %v1305, %v1309
  %v1314 = vand.u32 2147483647, %v1304
  %vm1315 = vcmp.eq.f32.partialorder %v1314, 8.507059e+37
  %v1316 = vand.u32 %v1304, 2147483648
  %v1317 = vor.u32 1.1754944e-38, %v1316
  %v1318 = vsel %vm1315, %v1317, %v1313
  %v1319 = vmul.f32 1.0, %v1318
  %v1320 = vadd.f32 %v1298, %v160
  %1322 = vrot.lane.b32.xlu0 %v1320, 64
  %v1323 = vpop.permute.xlu0 %1322
  %v1325 = vmul.f32 %v1319, %v1323
  %1327 = vrot.lane.b32.xlu0 %v1325, 64
  %v1328 = vpop.permute.xlu0 %1327
  %v1330 = vadd.f32 %v1270, %v1328
  %v1331 = vtanh.pop %v1330
  %v1332 = vsub.f32 1.0, %v1319
  %1334 = vrot.lane.b32.xlu0 %v1331, 96
  %v1335 = vpop.permute.xlu0 %1334
  %v1337 = vmul.f32 %v1332, %v1335
  %v1338 = vmul.f32 %v1319, %v1224
  %v1339 = vadd.f32 %v1337, %v1338
  %1341 = vrot.lane.b32.xlu0 %v1339, 96
  %v1342 = vpop.permute.xlu0 %1341
  %v1343 = vsel %vm113, %v1342, 0
  %1345 = vmatpush.msra.mxu0 0.0
  %1346 = vmatpush.msra.mxu0 0.0
  %1347 = vmatpush.msra.mxu0 0.0
  %1348 = vmatpush.msra.mxu0 0.0
  %1349 = vmatpush.msra.mxu0 0.0
  %1350 = vmatpush.msra.mxu0 0.0
  %1351 = vmatpush.msra.mxu0 0.0
  %1352 = vmatpush.msra.mxu0 0.0
  %1353 = vmatpush.msra.mxu0 0.0
  %1354 = vmatpush.msra.mxu0 0.0
  %1355 = vmatpush.msra.mxu0 0.0
  %1356 = vmatpush.msra.mxu0 0.0
  %1357 = vmatpush.msra.mxu0 %v35
  %1358 = vmatpush.msra.mxu0 %v33
  %1359 = vmatpush.msra.mxu0 %v31
  %1360 = vmatpush.msra.mxu0 %v29
  %1361 = vmatmul.f32.gmra.mxu0 %v1343
  %v1362 = vpop.f32.mrf.mxu0
  %v1363 = vadd.f32 %v648, %v1362
  %1364 = vdwg.mxu0
  %1365 = vmatpush.msra.mxu0 0.0
  %1366 = vmatpush.msra.mxu0 0.0
  %1367 = vmatpush.msra.mxu0 0.0
  %1368 = vmatpush.msra.mxu0 0.0
  %1369 = vmatpush.msra.mxu0 0.0
  %1370 = vmatpush.msra.mxu0 0.0
  %1371 = vmatpush.msra.mxu0 0.0
  %1372 = vmatpush.msra.mxu0 0.0
  %1373 = vmatpush.msra.mxu0 0.0
  %1374 = vmatpush.msra.mxu0 0.0
  %1375 = vmatpush.msra.mxu0 0.0
  %1376 = vmatpush.msra.mxu0 0.0
  %1377 = vmatpush.msra.mxu0 %v36
  %1378 = vmatpush.msra.mxu0 %v34
  %1379 = vmatpush.msra.mxu0 %v32
  %1380 = vmatpush.msra.mxu0 %v30
  %1381 = vmatmul.f32.gmra.mxu0 %v1343
  %v1382 = vpop.f32.mrf.mxu0
  %v1383 = vadd.f32 %v649, %v1382
  %1384 = vdwg.mxu0
  %v1385 = vadd.f32 %v1270, %v1363
  %1388 = vrot.lane.b32.xlu0 %v1363, 32
  %v1389 = vpop.permute.xlu0 %1388
  %1390 = vrot.lane.b32.xlu0 %v1383, 32
  %v1391 = vpop.permute.xlu0 %1390
  %v1392 = vsel %vm113, %v1389, %v1391
  %v1394 = vadd.f32 %v1279, %v1392
  %1395 = vmatpush.msra.mxu0 0.0
  %1396 = vmatpush.msra.mxu0 0.0
  %1397 = vmatpush.msra.mxu0 0.0
  %1398 = vmatpush.msra.mxu0 0.0
  %1399 = vmatpush.msra.mxu0 0.0
  %1400 = vmatpush.msra.mxu0 0.0
  %1401 = vmatpush.msra.mxu0 0.0
  %1402 = vmatpush.msra.mxu0 0.0
  %1403 = vmatpush.msra.mxu0 0.0
  %1404 = vmatpush.msra.mxu0 0.0
  %1405 = vmatpush.msra.mxu0 0.0
  %1406 = vmatpush.msra.mxu0 0.0
  %1407 = vmatpush.msra.mxu0 %v28
  %1408 = vmatpush.msra.mxu0 %v27
  %1409 = vmatpush.msra.mxu0 %v26
  %1410 = vmatpush.msra.mxu0 %v25
  %1411 = vmatmul.f32.gmra.mxu0 %v1343
  %v1412 = vpop.f32.mrf.mxu0
  %v1413 = vadd.f32 0.0, %v1412
  %1414 = vdwg.mxu0
  %v1415 = vadd.f32 %v1385, %v1413
  %v1416 = vxor.u32 %v1415, 2147483648
  %v1417 = vmul.f32 %v1416, 1.442695
  %v1418 = vpow.pop %v1417
  %v1419 = vadd.f32 %v1418, 1.0
  %v1420 = vrcp.pop %v1419
  %v1421 = vmul.f32 %v1419, %v1420
  %v1422 = vsub.f32 1.0, %v1421
  %v1423 = vmul.f32 %v1420, %v1422
  %v1424 = vadd.f32 %v1420, %v1423
  %vm1425 = vweird.f32 %v1419
  %vm1426 = vweird.f32 %v1420
  %vm1427 = vmor %vm1425, %vm1426
  %v1428 = vsel %vm1427, %v1420, %v1424
  %v1429 = vand.u32 2147483647, %v1419
  %vm1430 = vcmp.eq.f32.partialorder %v1429, 8.507059e+37
  %v1431 = vand.u32 %v1419, 2147483648
  %v1432 = vor.u32 1.1754944e-38, %v1431
  %v1433 = vsel %vm1430, %v1432, %v1428
  %v1434 = vmul.f32 1.0, %v1433
  %v1435 = vadd.f32 %v1413, %v160
  %1437 = vrot.lane.b32.xlu0 %v1435, 64
  %v1438 = vpop.permute.xlu0 %1437
  %v1440 = vmul.f32 %v1434, %v1438
  %1442 = vrot.lane.b32.xlu0 %v1440, 64
  %v1443 = vpop.permute.xlu0 %1442
  %v1445 = vadd.f32 %v1385, %v1443
  %v1446 = vtanh.pop %v1445
  %v1447 = vsub.f32 1.0, %v1434
  %1449 = vrot.lane.b32.xlu0 %v1446, 96
  %v1450 = vpop.permute.xlu0 %1449
  %v1452 = vmul.f32 %v1447, %v1450
  %v1453 = vmul.f32 %v1434, %v1339
  %v1454 = vadd.f32 %v1452, %v1453
  %1456 = vrot.lane.b32.xlu0 %v1454, 96
  %v1457 = vpop.permute.xlu0 %1456
  %v1458 = vsel %vm113, %v1457, 0
  %1460 = vmatpush.msra.mxu0 0.0
  %1461 = vmatpush.msra.mxu0 0.0
  %1462 = vmatpush.msra.mxu0 0.0
  %1463 = vmatpush.msra.mxu0 0.0
  %1464 = vmatpush.msra.mxu0 0.0
  %1465 = vmatpush.msra.mxu0 0.0
  %1466 = vmatpush.msra.mxu0 0.0
  %1467 = vmatpush.msra.mxu0 0.0
  %1468 = vmatpush.msra.mxu0 0.0
  %1469 = vmatpush.msra.mxu0 0.0
  %1470 = vmatpush.msra.mxu0 0.0
  %1471 = vmatpush.msra.mxu0 0.0
  %1472 = vmatpush.msra.mxu0 %v35
  %1473 = vmatpush.msra.mxu0 %v33
  %1474 = vmatpush.msra.mxu0 %v31
  %1475 = vmatpush.msra.mxu0 %v29
  %1476 = vmatmul.f32.gmra.mxu0 %v1458
  %v1477 = vpop.f32.mrf.mxu0
  %v1478 = vadd.f32 %v648, %v1477
  %1479 = vdwg.mxu0
  %1480 = vmatpush.msra.mxu0 0.0
  %1481 = vmatpush.msra.mxu0 0.0
  %1482 = vmatpush.msra.mxu0 0.0
  %1483 = vmatpush.msra.mxu0 0.0
  %1484 = vmatpush.msra.mxu0 0.0
  %1485 = vmatpush.msra.mxu0 0.0
  %1486 = vmatpush.msra.mxu0 0.0
  %1487 = vmatpush.msra.mxu0 0.0
  %1488 = vmatpush.msra.mxu0 0.0
  %1489 = vmatpush.msra.mxu0 0.0
  %1490 = vmatpush.msra.mxu0 0.0
  %1491 = vmatpush.msra.mxu0 0.0
  %1492 = vmatpush.msra.mxu0 %v36
  %1493 = vmatpush.msra.mxu0 %v34
  %1494 = vmatpush.msra.mxu0 %v32
  %1495 = vmatpush.msra.mxu0 %v30
  %1496 = vmatmul.f32.gmra.mxu0 %v1458
  %v1497 = vpop.f32.mrf.mxu0
  %v1498 = vadd.f32 %v649, %v1497
  %1499 = vdwg.mxu0
  %1502 = vrot.lane.b32.xlu0 %v1478, 32
  %v1503 = vpop.permute.xlu0 %1502
  %1504 = vrot.lane.b32.xlu0 %v1498, 32
  %v1505 = vpop.permute.xlu0 %1504
  %v1506 = vsel %vm113, %v1503, %v1505
  %v1508 = vadd.f32 %v1394, %v1506
  %1509 = vst.msk [vmem:[%s4] sm:$0xff] %vm47, %v704
  %1510 = vst.msk [vmem:[%s4 + $0x8] sm:$0xff] %vm47, %v819
  %1511 = vst.msk [vmem:[%s4 + $0x10] sm:$0xff] %vm47, %v934
  %1512 = vst.msk [vmem:[%s4 + $0x18] sm:$0xff] %vm47, %v1049
  %1513 = vst.msk [vmem:[%s4 + $0x20] sm:$0xff] %vm47, %v1164
  %1514 = vst.msk [vmem:[%s4 + $0x28] sm:$0xff] %vm47, %v1279
  %1515 = vst.msk [vmem:[%s4 + $0x30] sm:$0xff] %vm47, %v1394
  %1516 = vst.msk [vmem:[%s4 + $0x38] sm:$0xff] %vm47, %v1508
  // Predicated region
  $region18: #{generator_rnn_forward.1} parent=0 // pred_check
    _
  $region19: #{generator_rnn_forward.1} parent=0 // pred_check_branch
    %1518 = sbr.rel (0) target = $region21
  $region20: #{generator_rnn_forward.1} parent=0 // pred_region
    _
  $region21: #{generator_rnn_forward.1} parent=0 // pred_fallthru
    _
  // Predicated region
  $region22: #{generator_rnn_forward.1} parent=0 // pred_check
    _
  $region23: #{generator_rnn_forward.1} parent=0 // pred_check_branch
    %1520 = sbr.rel (0) target = $region25
  $region24: #{generator_rnn_forward.1} parent=0 // pred_region
    _
  $region25: #{generator_rnn_forward.1} parent=0 // pred_fallthru
    _

</llo_original>
